<compile_context>
chip_gen: v6e
topology: v6e:2x2x1
jax: 0.10.0
libtpu: 0.0.40
codegen_flags: <defaults>
</compile_context>

<pallas_src>
import math
from functools import partial

import jax
import jax.numpy as jnp
from jax.experimental import pallas as pl
from jax.experimental.pallas import tpu as pltpu


def _layer_norm(v, gamma, beta, eps=1e-5):
    # torch.nn.LayerNorm semantics: biased variance, eps inside the sqrt, affine.
    mu = jnp.mean(v, axis=-1, keepdims=True)
    var = jnp.mean((v - mu) ** 2, axis=-1, keepdims=True)
    return (v - mu) * jax.lax.rsqrt(var + eps) * gamma + beta


def _erf(x):
    # Abramowitz & Stegun 7.1.26 (|abs err| <= 1.5e-7). Built from exp/mul/add/where
    # only, so it lowers on Mosaic; matches torch's exact GELU to ~f32 precision.
    a1, a2, a3, a4, a5 = 0.254829592, -0.284496736, 1.421413741, -1.453152027, 1.061405429
    p = 0.3275911
    z = jnp.abs(x)
    t = 1.0 / (1.0 + p * z)
    poly = ((((a5 * t + a4) * t + a3) * t + a2) * t + a1) * t
    y = 1.0 - poly * jnp.exp(-z * z)
    return jnp.where(x < 0.0, -y, y)


def _res_post_block_kernel(
    xq_ref,              # (1, TQ, C) f32: query tile (residual path + Q projection input)
    xkv_ref,             # (1, N,  C) bf16: full sequence (K/V projections, used at t==0 only)
    wq_ref, wk_ref, wv_ref, wproj_ref,   # (C, C) bf16
    wfc1_ref, wfc2_ref,                  # (C, hidden) / (hidden, C) bf16
    bqkv_ref,            # (3, 1, C)  f32: bq, bk, bv
    lnqk_ref,            # (4, 1, Dh) f32: q_gamma*scale, q_beta*scale, k_gamma, k_beta
    bfc1_ref,            # (1, hidden) f32
    cvecs_ref,           # (6, 1, C)  f32: bproj, g1, b1, g2, b2, bfc2
    out_ref,             # (1, TQ, C)
    k_vmem, v_vmem,      # (N, C) compute-dtype scratch, persistent across the t axis
    *, num_heads, compute_dtype,
):
    cdt = compute_dtype
    H = num_heads
    C = wq_ref.shape[0]
    Dh = C // H

    # ---------- once per batch element: full-width K/V into VMEM scratch ----------
    @pl.when(pl.program_id(1) == 0)
    def _():
        xkv = xkv_ref[0]                                                   # (N, C) bf16
        k_full = jnp.dot(xkv, wk_ref[...],
                         preferred_element_type=jnp.float32) + bqkv_ref[1]  # (N, C) f32
        v_full = jnp.dot(xkv, wv_ref[...],
                         preferred_element_type=jnp.float32) + bqkv_ref[2]  # (N, C) f32
        kg, kb = lnqk_ref[2], lnqk_ref[3]                                   # (1, Dh)
        k_parts = [_layer_norm(k_full[:, h * Dh:(h + 1) * Dh], kg, kb) for h in range(H)]
        k_vmem[...] = jnp.concatenate(k_parts, axis=-1).astype(cdt)        # lane-dense store
        v_vmem[...] = v_full.astype(cdt)

    # ---------- per query tile: Q projection (full width) ----------
    xq = xq_ref[0]                                                          # (TQ, C) f32 residual
    q_full = jnp.dot(xq.astype(cdt), wq_ref[...],
                     preferred_element_type=jnp.float32) + bqkv_ref[0]      # (TQ, C) f32
    qg, qb = lnqk_ref[0], lnqk_ref[1]                                       # scale already folded

    # ---------- attention core: heads sliced only for score / PV matmuls ----------
    # TODO(synk): for H >= 12 consider lax.fori_loop with unroll=2..4 and dynamic lane
    # slices to bound instruction-memory / live ranges instead of a full static unroll.
    o_parts = []
    for h in range(H):
        sl = slice(h * Dh, (h + 1) * Dh)
        qh = _layer_norm(q_full[:, sl], qg, qb).astype(cdt)                 # (TQ, Dh)
        kh = k_vmem[:, sl]                                                  # (N,  Dh) bf16
        s = jax.lax.dot_general(qh, kh, (((1,), (1,)), ((), ())),
                                preferred_element_type=jnp.float32)         # (TQ, N)
        s = s - jnp.max(s, axis=-1, keepdims=True)
        p = jnp.exp(s)
        p = p * pl.reciprocal(jnp.sum(p, axis=-1, keepdims=True), approx=True)
        o_parts.append(jnp.dot(p.astype(cdt), v_vmem[:, sl],
                               preferred_element_type=jnp.float32))         # (TQ, Dh)
    o = jnp.concatenate(o_parts, axis=-1)                                   # (TQ, C) f32

    # Single full-width output projection.
    attn = jnp.dot(o.astype(cdt), wproj_ref[...],
                   preferred_element_type=jnp.float32) + cvecs_ref[0]

    # ---------- x = x + norm1(attn(x)) ----------
    x1 = xq + _layer_norm(attn, cvecs_ref[1], cvecs_ref[2])

    # ---------- MLP: fc1 -> exact GELU -> fc2 ----------
    hdn = jnp.dot(x1.astype(cdt), wfc1_ref[...],
                  preferred_element_type=jnp.float32) + bfc1_ref[...]
    hdn = 0.5 * hdn * (1.0 + _erf(hdn * (1.0 / math.sqrt(2.0))))
    mlp = jnp.dot(hdn.astype(cdt), wfc2_ref[...],
                  preferred_element_type=jnp.float32) + cvecs_ref[5]

    # ---------- x = x + norm2(mlp(x)) ----------
    out_ref[0] = (x1 + _layer_norm(mlp, cvecs_ref[3], cvecs_ref[4])).astype(out_ref.dtype)


def res_post_block(x, params, num_heads, *, compute_dtype=jnp.bfloat16, q_tile=128):
    """x: (B, N, C) float32. Returns (B, N, C) float32."""
    B, N, C = x.shape
    H = num_heads
    assert C % H == 0
    Dh = C // H

    # Query-tile rows: the full sequence if it fits, otherwise a fixed multiple of 8;
    # the ragged last tile is handled by Pallas' out-of-bounds padding/masking.
    if N <= q_tile:
        tq = N
    else:
        tq = max(8, (q_tile // 8) * 8)
    nq = (N + tq - 1) // tq

    wdt = compute_dtype
    f32 = jnp.float32
    scale = Dh ** -0.5

    # qkv weight columns are ordered [q | k | v], each block head-contiguous.
    wqkv = params["wqkv"]
    wq = wqkv[:, :C].astype(wdt)
    wk = wqkv[:, C:2 * C].astype(wdt)
    wv = wqkv[:, 2 * C:].astype(wdt)
    bqkv = params["bqkv"].astype(f32).reshape(3, 1, C)                       # bq, bk, bv
    # Fold the 1/sqrt(Dh) SDPA scale into q_norm's affine parameters.
    lnqk = jnp.stack([params["q_gamma"] * scale, params["q_beta"] * scale,
                      params["k_gamma"], params["k_beta"]])[:, None, :].astype(f32)
    wproj = params["wproj"].astype(wdt)
    wfc1 = params["wfc1"].astype(wdt)
    bfc1 = params["bfc1"][None, :].astype(f32)
    wfc2 = params["wfc2"].astype(wdt)
    cvecs = jnp.stack([params["bproj"], params["g1"], params["b1"],
                       params["g2"], params["b2"], params["bfc2"]])[:, None, :].astype(f32)

    weights = [wq, wk, wv, wproj, wfc1, wfc2, bqkv, lnqk, bfc1, cvecs]

    def full_spec(w):
        zeros = (0,) * w.ndim
        return pl.BlockSpec(w.shape, lambda b, t, _z=zeros: _z)

    in_specs = [
        pl.BlockSpec((1, tq, C), lambda b, t: (b, t, 0)),   # f32 query tile
        pl.BlockSpec((1, N, C), lambda b, t: (b, 0, 0)),    # bf16 full sequence (re-used across t)
    ] + [full_spec(w) for w in weights]
    out_spec = pl.BlockSpec((1, tq, C), lambda b, t: (b, t, 0))

    # TODO(synk): on v7x (64 MiB VMEM) with large C, single-buffer the constant weight
    # blocks and tile wfc1/wfc2 over a hidden-dim grid axis (or a second pallas_call);
    # on v5e/v6e (128 MiB) vmem_limit_bytes can be raised and q_tile increased to 256.
    return pl.pallas_call(
        partial(_res_post_block_kernel, num_heads=H, compute_dtype=compute_dtype),
        out_shape=jax.ShapeDtypeStruct((B, N, C), x.dtype),
        grid=(B, nq),
        in_specs=in_specs,
        out_specs=out_spec,
        scratch_shapes=[pltpu.VMEM((N, C), compute_dtype),   # K (q/k-normed), persistent per b
                        pltpu.VMEM((N, C), compute_dtype)],  # V, persistent per b
        compiler_params=pltpu.CompilerParams(
            dimension_semantics=("parallel", "arbitrary"),
            vmem_limit_bytes=48 * 1024 * 1024,
        ),
    )(x, x.astype(compute_dtype), *weights)


def _reference(x, params, num_heads, matmul_dtype=jnp.float32):
    """Pure-JAX reference; matmul_dtype mirrors the kernel's MXU input dtype."""
    B, N, C = x.shape
    H, Dh = num_heads, C // num_heads
    mdt = matmul_dtype

    def ln(v, g, b, eps=1e-5):
        mu = jnp.mean(v, -1, keepdims=True)
        var = jnp.mean((v - mu) ** 2, -1, keepdims=True)
        return (v - mu) / jnp.sqrt(var + eps) * g + b

    def mm(a, b):
        return jnp.matmul(a.astype(mdt), b.astype(mdt),
                          preferred_element_type=jnp.float32)

    qkv = mm(x, params["wqkv"]) + params["bqkv"]                  # (B,N,3C)
    qkv = qkv.reshape(B, N, 3, H, Dh).transpose(2, 0, 3, 1, 4)    # (3,B,H,N,Dh)
    q, k, v = qkv[0], qkv[1], qkv[2]
    q = ln(q, params["q_gamma"], params["q_beta"])
    k = ln(k, params["k_gamma"], params["k_beta"])
    s = jnp.einsum("bhnd,bhmd->bhnm", (q * Dh ** -0.5).astype(mdt), k.astype(mdt),
                   preferred_element_type=jnp.float32)
    p = jax.nn.softmax(s, axis=-1)
    a = jnp.einsum("bhnm,bhmd->bhnd", p.astype(mdt), v.astype(mdt),
                   preferred_element_type=jnp.float32)
    a = a.transpose(0, 2, 1, 3).reshape(B, N, C)
    a = mm(a, params["wproj"]) + params["bproj"]
    x1 = x + ln(a, params["g1"], params["b1"])
    h = mm(x1, params["wfc1"]) + params["bfc1"]
    h = 0.5 * h * (1.0 + jax.lax.erf(h / math.sqrt(2.0)))
    m = mm(h, params["wfc2"]) + params["bfc2"]
    return x1 + ln(m, params["g2"], params["b2"])


if __name__ == "__main__":
    # Small shapes consistent with the module: dim=32, 4 heads, mlp_ratio=4, seq=8.
    B, N, C = 2, 8, 32
    num_heads = 4
    hidden = int(C * 4.0)

    key = jax.random.PRNGKey(0)
    ks = jax.random.split(key, 10)
    f32 = jnp.float32
    params = {
        # Attention.qkv (Linear(dim, 3*dim, bias=True)), stored as x @ W + b
        "wqkv": 0.02 * jax.random.normal(ks[0], (C, 3 * C), f32),
        "bqkv": 0.01 * jax.random.normal(ks[1], (3 * C,), f32),
        # q_norm / k_norm = LayerNorm(head_dim)
        "q_gamma": jnp.ones((C // num_heads,), f32),
        "q_beta": jnp.zeros((C // num_heads,), f32),
        "k_gamma": jnp.ones((C // num_heads,), f32),
        "k_beta": jnp.zeros((C // num_heads,), f32),
        # Attention.proj (Linear(dim, dim))
        "wproj": 0.02 * jax.random.normal(ks[2], (C, C), f32),
        "bproj": 0.01 * jax.random.normal(ks[3], (C,), f32),
        # norm1 = LayerNorm(dim)  (init_values=None -> weight stays 1)
        "g1": jnp.ones((C,), f32),
        "b1": jnp.zeros((C,), f32),
        # LinearMLP: fc1 (dim -> hidden), GELU(exact), fc2 (hidden -> dim)
        "wfc1": 0.02 * jax.random.normal(ks[4], (C, hidden), f32),
        "bfc1": 0.01 * jax.random.normal(ks[5], (hidden,), f32),
        "wfc2": 0.02 * jax.random.normal(ks[6], (hidden, C), f32),
        "bfc2": 0.01 * jax.random.normal(ks[7], (C,), f32),
        # norm2 = LayerNorm(dim)
        "g2": jnp.ones((C,), f32),
        "b2": jnp.zeros((C,), f32),
    }

    x = jax.random.normal(ks[8], (B, N, C), f32)

    out = res_post_block(x, params, num_heads)
    jax.block_until_ready(out)
    assert out.shape == (B, N, C) and out.dtype == jnp.float32

    # Tight-ish check vs a reference that mirrors the bf16 MXU inputs (structure check),
    # looser check vs the exact f32 torch-semantics reference (bf16 rounding only).
    ref_bf16 = _reference(x, params, num_heads, matmul_dtype=jnp.bfloat16)
    ref_f32 = _reference(x, params, num_heads, matmul_dtype=jnp.float32)
    err_bf16 = float(jnp.max(jnp.abs(out - ref_bf16)))
    err_f32 = float(jnp.max(jnp.abs(out - ref_f32)))
    assert err_bf16 < 5e-2, f"mismatch vs bf16-matmul reference: {err_bf16}"
    assert err_f32 < 2e-1, f"mismatch vs f32 reference: {err_f32}"

    print("KERNEL_OK")
</pallas_src>

<mosaic_0001>
module attributes {stable_mosaic.version = 11 : i64} {
  func.func @_res_post_block_kernel(%arg0: i32, %arg1: i32, %arg2: memref<1x8x32xf32, #tpu.memory_space<vmem>>, %arg3: memref<1x8x32xbf16, #tpu.memory_space<vmem>>, %arg4: memref<32x32xbf16, #tpu.memory_space<vmem>>, %arg5: memref<32x32xbf16, #tpu.memory_space<vmem>>, %arg6: memref<32x32xbf16, #tpu.memory_space<vmem>>, %arg7: memref<32x32xbf16, #tpu.memory_space<vmem>>, %arg8: memref<32x128xbf16, #tpu.memory_space<vmem>>, %arg9: memref<128x32xbf16, #tpu.memory_space<vmem>>, %arg10: memref<3x1x32xf32, #tpu.memory_space<vmem>>, %arg11: memref<4x1x8xf32, #tpu.memory_space<vmem>>, %arg12: memref<1x128xf32, #tpu.memory_space<vmem>>, %arg13: memref<6x1x32xf32, #tpu.memory_space<vmem>>, %arg14: memref<1x8x32xf32, #tpu.memory_space<vmem>>, %arg15: memref<8x32xbf16, #tpu.memory_space<vmem>>, %arg16: memref<8x32xbf16, #tpu.memory_space<vmem>>) attributes {dimension_semantics = [#tpu.dimension_semantics<parallel>, #tpu.dimension_semantics<arbitrary>], iteration_bounds = array<i64: 2, 1>, scalar_prefetch = 0 : i64, scratch_operands = 2 : i64, tpu.core_type = #tpu.core_type<tc>, window_params = [{transform_indices = @transform_0, window_bounds = array<i64: 1, 8, 32>}, {transform_indices = @transform_1, window_bounds = array<i64: 1, 8, 32>}, {pipeline_mode = #tpu.pipeline_mode<synchronous>, transform_indices = @transform_2, window_bounds = array<i64: 32, 32>}, {pipeline_mode = #tpu.pipeline_mode<synchronous>, transform_indices = @transform_3, window_bounds = array<i64: 32, 32>}, {pipeline_mode = #tpu.pipeline_mode<synchronous>, transform_indices = @transform_4, window_bounds = array<i64: 32, 32>}, {pipeline_mode = #tpu.pipeline_mode<synchronous>, transform_indices = @transform_5, window_bounds = array<i64: 32, 32>}, {pipeline_mode = #tpu.pipeline_mode<synchronous>, transform_indices = @transform_6, window_bounds = array<i64: 32, 128>}, {pipeline_mode = #tpu.pipeline_mode<synchronous>, transform_indices = @transform_7, window_bounds = array<i64: 128, 32>}, {pipeline_mode = #tpu.pipeline_mode<synchronous>, transform_indices = @transform_8, window_bounds = array<i64: 3, 1, 32>}, {pipeline_mode = #tpu.pipeline_mode<synchronous>, transform_indices = @transform_9, window_bounds = array<i64: 4, 1, 8>}, {pipeline_mode = #tpu.pipeline_mode<synchronous>, transform_indices = @transform_10, window_bounds = array<i64: 1, 128>}, {pipeline_mode = #tpu.pipeline_mode<synchronous>, transform_indices = @transform_11, window_bounds = array<i64: 6, 1, 32>}, {transform_indices = @transform_12, window_bounds = array<i64: 1, 8, 32>}]} {
    %c0_i32 = arith.constant 0 : i32
    %0 = arith.cmpi eq, %arg1, %c0_i32 : i32
    %1 = arith.extui %0 : i1 to i32
    %c0_i32_0 = arith.constant 0 : i32
    %2 = arith.cmpi ne, %1, %c0_i32_0 : i32
    scf.if %2 {
      %c0_115 = arith.constant 0 : index
      %c0_116 = arith.constant 0 : index
      %c0_117 = arith.constant 0 : index
      %290 = vector.load %arg3[%c0_115, %c0_116, %c0_117] : memref<1x8x32xbf16, #tpu.memory_space<vmem>>, vector<1x8x32xbf16>
      %291 = vector.shape_cast %290 : vector<1x8x32xbf16> to vector<8x32xbf16>
      %c0_118 = arith.constant 0 : index
      %c0_119 = arith.constant 0 : index
      %292 = vector.load %arg5[%c0_118, %c0_119] : memref<32x32xbf16, #tpu.memory_space<vmem>>, vector<32x32xbf16>
      %cst_120 = arith.constant dense<0.000000e+00> : vector<8x32xf32>
      %293 = tpu.matmul %291, %292, %cst_120 {dimension_numbers = #tpu.dot_dimension_numbers<[1], [0], [0], [1], [0, 0, 1, 1], [], []>} : vector<8x32xbf16>, vector<32x32xbf16>, vector<8x32xf32> -> vector<8x32xf32>
      %c1_121 = arith.constant 1 : index
      %c0_122 = arith.constant 0 : index
      %c0_123 = arith.constant 0 : index
      %294 = vector.load %arg10[%c1_121, %c0_122, %c0_123] : memref<3x1x32xf32, #tpu.memory_space<vmem>>, vector<1x1x32xf32>
      %295 = vector.shape_cast %294 : vector<1x1x32xf32> to vector<1x32xf32>
      %296 = vector.broadcast %295 : vector<1x32xf32> to vector<8x32xf32>
      %297 = arith.addf %293, %296 : vector<8x32xf32>
      %c0_124 = arith.constant 0 : index
      %c0_125 = arith.constant 0 : index
      %298 = vector.load %arg6[%c0_124, %c0_125] : memref<32x32xbf16, #tpu.memory_space<vmem>>, vector<32x32xbf16>
      %cst_126 = arith.constant dense<0.000000e+00> : vector<8x32xf32>
      %299 = tpu.matmul %291, %298, %cst_126 {dimension_numbers = #tpu.dot_dimension_numbers<[1], [0], [0], [1], [0, 0, 1, 1], [], []>} : vector<8x32xbf16>, vector<32x32xbf16>, vector<8x32xf32> -> vector<8x32xf32>
      %c2_127 = arith.constant 2 : index
      %c0_128 = arith.constant 0 : index
      %c0_129 = arith.constant 0 : index
      %300 = vector.load %arg10[%c2_127, %c0_128, %c0_129] : memref<3x1x32xf32, #tpu.memory_space<vmem>>, vector<1x1x32xf32>
      %301 = vector.shape_cast %300 : vector<1x1x32xf32> to vector<1x32xf32>
      %302 = vector.broadcast %301 : vector<1x32xf32> to vector<8x32xf32>
      %303 = arith.addf %299, %302 : vector<8x32xf32>
      %c2_130 = arith.constant 2 : index
      %c0_131 = arith.constant 0 : index
      %c0_132 = arith.constant 0 : index
      %304 = vector.load %arg11[%c2_130, %c0_131, %c0_132] : memref<4x1x8xf32, #tpu.memory_space<vmem>>, vector<1x1x8xf32>
      %305 = vector.shape_cast %304 : vector<1x1x8xf32> to vector<1x8xf32>
      %c3_133 = arith.constant 3 : index
      %c0_134 = arith.constant 0 : index
      %c0_135 = arith.constant 0 : index
      %306 = vector.load %arg11[%c3_133, %c0_134, %c0_135] : memref<4x1x8xf32, #tpu.memory_space<vmem>>, vector<1x1x8xf32>
      %307 = vector.shape_cast %306 : vector<1x1x8xf32> to vector<1x8xf32>
      %308 = vector.extract_strided_slice %297 {offsets = [0, 0], sizes = [8, 8], strides = [1, 1]} : vector<8x32xf32> to vector<8x8xf32>
      %cst_136 = arith.constant dense<0.000000e+00> : vector<8xf32>
      %309 = vector.multi_reduction <add>, %308, %cst_136 [1] : vector<8x8xf32> to vector<8xf32>
      %310 = vector.shape_cast %309 : vector<8xf32> to vector<8x1xf32>
      %cst_137 = arith.constant 8.000000e+00 : f32
      %311 = vector.broadcast %cst_137 : f32 to vector<8x1xf32>
      %312 = arith.divf %310, %311 : vector<8x1xf32>
      %313 = vector.broadcast %312 : vector<8x1xf32> to vector<8x8xf32>
      %314 = arith.subf %308, %313 : vector<8x8xf32>
      %315 = arith.mulf %314, %314 : vector<8x8xf32>
      %cst_138 = arith.constant dense<0.000000e+00> : vector<8xf32>
      %316 = vector.multi_reduction <add>, %315, %cst_138 [1] : vector<8x8xf32> to vector<8xf32>
      %317 = vector.shape_cast %316 : vector<8xf32> to vector<8x1xf32>
      %cst_139 = arith.constant 8.000000e+00 : f32
      %318 = vector.broadcast %cst_139 : f32 to vector<8x1xf32>
      %319 = arith.divf %317, %318 : vector<8x1xf32>
      %320 = vector.broadcast %312 : vector<8x1xf32> to vector<8x8xf32>
      %321 = arith.subf %308, %320 : vector<8x8xf32>
      %cst_140 = arith.constant 9.99999974E-6 : f32
      %322 = vector.broadcast %cst_140 : f32 to vector<8x1xf32>
      %323 = arith.addf %319, %322 : vector<8x1xf32>
      %324 = math.rsqrt %323 : vector<8x1xf32>
      %325 = vector.broadcast %324 : vector<8x1xf32> to vector<8x8xf32>
      %326 = arith.mulf %321, %325 : vector<8x8xf32>
      %327 = vector.broadcast %305 : vector<1x8xf32> to vector<8x8xf32>
      %328 = arith.mulf %326, %327 : vector<8x8xf32>
      %329 = vector.broadcast %307 : vector<1x8xf32> to vector<8x8xf32>
      %330 = arith.addf %328, %329 : vector<8x8xf32>
      %331 = vector.extract_strided_slice %297 {offsets = [0, 8], sizes = [8, 8], strides = [1, 1]} : vector<8x32xf32> to vector<8x8xf32>
      %cst_141 = arith.constant dense<0.000000e+00> : vector<8xf32>
      %332 = vector.multi_reduction <add>, %331, %cst_141 [1] : vector<8x8xf32> to vector<8xf32>
      %333 = vector.shape_cast %332 : vector<8xf32> to vector<8x1xf32>
      %cst_142 = arith.constant 8.000000e+00 : f32
      %334 = vector.broadcast %cst_142 : f32 to vector<8x1xf32>
      %335 = arith.divf %333, %334 : vector<8x1xf32>
      %336 = vector.broadcast %335 : vector<8x1xf32> to vector<8x8xf32>
      %337 = arith.subf %331, %336 : vector<8x8xf32>
      %338 = arith.mulf %337, %337 : vector<8x8xf32>
      %cst_143 = arith.constant dense<0.000000e+00> : vector<8xf32>
      %339 = vector.multi_reduction <add>, %338, %cst_143 [1] : vector<8x8xf32> to vector<8xf32>
      %340 = vector.shape_cast %339 : vector<8xf32> to vector<8x1xf32>
      %cst_144 = arith.constant 8.000000e+00 : f32
      %341 = vector.broadcast %cst_144 : f32 to vector<8x1xf32>
      %342 = arith.divf %340, %341 : vector<8x1xf32>
      %343 = vector.broadcast %335 : vector<8x1xf32> to vector<8x8xf32>
      %344 = arith.subf %331, %343 : vector<8x8xf32>
      %cst_145 = arith.constant 9.99999974E-6 : f32
      %345 = vector.broadcast %cst_145 : f32 to vector<8x1xf32>
      %346 = arith.addf %342, %345 : vector<8x1xf32>
      %347 = math.rsqrt %346 : vector<8x1xf32>
      %348 = vector.broadcast %347 : vector<8x1xf32> to vector<8x8xf32>
      %349 = arith.mulf %344, %348 : vector<8x8xf32>
      %350 = vector.broadcast %305 : vector<1x8xf32> to vector<8x8xf32>
      %351 = arith.mulf %349, %350 : vector<8x8xf32>
      %352 = vector.broadcast %307 : vector<1x8xf32> to vector<8x8xf32>
      %353 = arith.addf %351, %352 : vector<8x8xf32>
      %354 = vector.extract_strided_slice %297 {offsets = [0, 16], sizes = [8, 8], strides = [1, 1]} : vector<8x32xf32> to vector<8x8xf32>
      %cst_146 = arith.constant dense<0.000000e+00> : vector<8xf32>
      %355 = vector.multi_reduction <add>, %354, %cst_146 [1] : vector<8x8xf32> to vector<8xf32>
      %356 = vector.shape_cast %355 : vector<8xf32> to vector<8x1xf32>
      %cst_147 = arith.constant 8.000000e+00 : f32
      %357 = vector.broadcast %cst_147 : f32 to vector<8x1xf32>
      %358 = arith.divf %356, %357 : vector<8x1xf32>
      %359 = vector.broadcast %358 : vector<8x1xf32> to vector<8x8xf32>
      %360 = arith.subf %354, %359 : vector<8x8xf32>
      %361 = arith.mulf %360, %360 : vector<8x8xf32>
      %cst_148 = arith.constant dense<0.000000e+00> : vector<8xf32>
      %362 = vector.multi_reduction <add>, %361, %cst_148 [1] : vector<8x8xf32> to vector<8xf32>
      %363 = vector.shape_cast %362 : vector<8xf32> to vector<8x1xf32>
      %cst_149 = arith.constant 8.000000e+00 : f32
      %364 = vector.broadcast %cst_149 : f32 to vector<8x1xf32>
      %365 = arith.divf %363, %364 : vector<8x1xf32>
      %366 = vector.broadcast %358 : vector<8x1xf32> to vector<8x8xf32>
      %367 = arith.subf %354, %366 : vector<8x8xf32>
      %cst_150 = arith.constant 9.99999974E-6 : f32
      %368 = vector.broadcast %cst_150 : f32 to vector<8x1xf32>
      %369 = arith.addf %365, %368 : vector<8x1xf32>
      %370 = math.rsqrt %369 : vector<8x1xf32>
      %371 = vector.broadcast %370 : vector<8x1xf32> to vector<8x8xf32>
      %372 = arith.mulf %367, %371 : vector<8x8xf32>
      %373 = vector.broadcast %305 : vector<1x8xf32> to vector<8x8xf32>
      %374 = arith.mulf %372, %373 : vector<8x8xf32>
      %375 = vector.broadcast %307 : vector<1x8xf32> to vector<8x8xf32>
      %376 = arith.addf %374, %375 : vector<8x8xf32>
      %377 = vector.extract_strided_slice %297 {offsets = [0, 24], sizes = [8, 8], strides = [1, 1]} : vector<8x32xf32> to vector<8x8xf32>
      %cst_151 = arith.constant dense<0.000000e+00> : vector<8xf32>
      %378 = vector.multi_reduction <add>, %377, %cst_151 [1] : vector<8x8xf32> to vector<8xf32>
      %379 = vector.shape_cast %378 : vector<8xf32> to vector<8x1xf32>
      %cst_152 = arith.constant 8.000000e+00 : f32
      %380 = vector.broadcast %cst_152 : f32 to vector<8x1xf32>
      %381 = arith.divf %379, %380 : vector<8x1xf32>
      %382 = vector.broadcast %381 : vector<8x1xf32> to vector<8x8xf32>
      %383 = arith.subf %377, %382 : vector<8x8xf32>
      %384 = arith.mulf %383, %383 : vector<8x8xf32>
      %cst_153 = arith.constant dense<0.000000e+00> : vector<8xf32>
      %385 = vector.multi_reduction <add>, %384, %cst_153 [1] : vector<8x8xf32> to vector<8xf32>
      %386 = vector.shape_cast %385 : vector<8xf32> to vector<8x1xf32>
      %cst_154 = arith.constant 8.000000e+00 : f32
      %387 = vector.broadcast %cst_154 : f32 to vector<8x1xf32>
      %388 = arith.divf %386, %387 : vector<8x1xf32>
      %389 = vector.broadcast %381 : vector<8x1xf32> to vector<8x8xf32>
      %390 = arith.subf %377, %389 : vector<8x8xf32>
      %cst_155 = arith.constant 9.99999974E-6 : f32
      %391 = vector.broadcast %cst_155 : f32 to vector<8x1xf32>
      %392 = arith.addf %388, %391 : vector<8x1xf32>
      %393 = math.rsqrt %392 : vector<8x1xf32>
      %394 = vector.broadcast %393 : vector<8x1xf32> to vector<8x8xf32>
      %395 = arith.mulf %390, %394 : vector<8x8xf32>
      %396 = vector.broadcast %305 : vector<1x8xf32> to vector<8x8xf32>
      %397 = arith.mulf %395, %396 : vector<8x8xf32>
      %398 = vector.broadcast %307 : vector<1x8xf32> to vector<8x8xf32>
      %399 = arith.addf %397, %398 : vector<8x8xf32>
      %400 = tpu.concatenate %330, %353, %376, %399 in 1 : vector<8x8xf32>, vector<8x8xf32>, vector<8x8xf32>, vector<8x8xf32> -> vector<8x32xf32>
      %401 = arith.truncf %400 : vector<8x32xf32> to vector<8x32xbf16>
      %c0_156 = arith.constant 0 : index
      %c0_157 = arith.constant 0 : index
      %402 = vector.load %arg15[%c0_156, %c0_157] : memref<8x32xbf16, #tpu.memory_space<vmem>>, vector<8x32xbf16>
      tpu.vector_store %arg15[%c0_156, %c0_157], %401 {strides = array<i32>} : memref<8x32xbf16, #tpu.memory_space<vmem>>, vector<8x32xbf16>,
      %403 = arith.truncf %303 : vector<8x32xf32> to vector<8x32xbf16>
      %c0_158 = arith.constant 0 : index
      %c0_159 = arith.constant 0 : index
      %404 = vector.load %arg16[%c0_158, %c0_159] : memref<8x32xbf16, #tpu.memory_space<vmem>>, vector<8x32xbf16>
      tpu.vector_store %arg16[%c0_158, %c0_159], %403 {strides = array<i32>} : memref<8x32xbf16, #tpu.memory_space<vmem>>, vector<8x32xbf16>,
    } else {
    }
    %c0 = arith.constant 0 : index
    %c0_1 = arith.constant 0 : index
    %c0_2 = arith.constant 0 : index
    %3 = vector.load %arg2[%c0, %c0_1, %c0_2] : memref<1x8x32xf32, #tpu.memory_space<vmem>>, vector<1x8x32xf32>
    %4 = vector.shape_cast %3 : vector<1x8x32xf32> to vector<8x32xf32>
    %5 = arith.truncf %4 : vector<8x32xf32> to vector<8x32xbf16>
    %c0_3 = arith.constant 0 : index
    %c0_4 = arith.constant 0 : index
    %6 = vector.load %arg4[%c0_3, %c0_4] : memref<32x32xbf16, #tpu.memory_space<vmem>>, vector<32x32xbf16>
    %cst = arith.constant dense<0.000000e+00> : vector<8x32xf32>
    %7 = tpu.matmul %5, %6, %cst {dimension_numbers = #tpu.dot_dimension_numbers<[1], [0], [0], [1], [0, 0, 1, 1], [], []>} : vector<8x32xbf16>, vector<32x32xbf16>, vector<8x32xf32> -> vector<8x32xf32>
    %c0_5 = arith.constant 0 : index
    %c0_6 = arith.constant 0 : index
    %c0_7 = arith.constant 0 : index
    %8 = vector.load %arg10[%c0_5, %c0_6, %c0_7] : memref<3x1x32xf32, #tpu.memory_space<vmem>>, vector<1x1x32xf32>
    %9 = vector.shape_cast %8 : vector<1x1x32xf32> to vector<1x32xf32>
    %10 = vector.broadcast %9 : vector<1x32xf32> to vector<8x32xf32>
    %11 = arith.addf %7, %10 : vector<8x32xf32>
    %c0_8 = arith.constant 0 : index
    %c0_9 = arith.constant 0 : index
    %c0_10 = arith.constant 0 : index
    %12 = vector.load %arg11[%c0_8, %c0_9, %c0_10] : memref<4x1x8xf32, #tpu.memory_space<vmem>>, vector<1x1x8xf32>
    %13 = vector.shape_cast %12 : vector<1x1x8xf32> to vector<1x8xf32>
    %c1 = arith.constant 1 : index
    %c0_11 = arith.constant 0 : index
    %c0_12 = arith.constant 0 : index
    %14 = vector.load %arg11[%c1, %c0_11, %c0_12] : memref<4x1x8xf32, #tpu.memory_space<vmem>>, vector<1x1x8xf32>
    %15 = vector.shape_cast %14 : vector<1x1x8xf32> to vector<1x8xf32>
    %16 = vector.extract_strided_slice %11 {offsets = [0, 0], sizes = [8, 8], strides = [1, 1]} : vector<8x32xf32> to vector<8x8xf32>
    %cst_13 = arith.constant dense<0.000000e+00> : vector<8xf32>
    %17 = vector.multi_reduction <add>, %16, %cst_13 [1] : vector<8x8xf32> to vector<8xf32>
    %18 = vector.shape_cast %17 : vector<8xf32> to vector<8x1xf32>
    %cst_14 = arith.constant 8.000000e+00 : f32
    %19 = vector.broadcast %cst_14 : f32 to vector<8x1xf32>
    %20 = arith.divf %18, %19 : vector<8x1xf32>
    %21 = vector.broadcast %20 : vector<8x1xf32> to vector<8x8xf32>
    %22 = arith.subf %16, %21 : vector<8x8xf32>
    %23 = arith.mulf %22, %22 : vector<8x8xf32>
    %cst_15 = arith.constant dense<0.000000e+00> : vector<8xf32>
    %24 = vector.multi_reduction <add>, %23, %cst_15 [1] : vector<8x8xf32> to vector<8xf32>
    %25 = vector.shape_cast %24 : vector<8xf32> to vector<8x1xf32>
    %cst_16 = arith.constant 8.000000e+00 : f32
    %26 = vector.broadcast %cst_16 : f32 to vector<8x1xf32>
    %27 = arith.divf %25, %26 : vector<8x1xf32>
    %28 = vector.broadcast %20 : vector<8x1xf32> to vector<8x8xf32>
    %29 = arith.subf %16, %28 : vector<8x8xf32>
    %cst_17 = arith.constant 9.99999974E-6 : f32
    %30 = vector.broadcast %cst_17 : f32 to vector<8x1xf32>
    %31 = arith.addf %27, %30 : vector<8x1xf32>
    %32 = math.rsqrt %31 : vector<8x1xf32>
    %33 = vector.broadcast %32 : vector<8x1xf32> to vector<8x8xf32>
    %34 = arith.mulf %29, %33 : vector<8x8xf32>
    %35 = vector.broadcast %13 : vector<1x8xf32> to vector<8x8xf32>
    %36 = arith.mulf %34, %35 : vector<8x8xf32>
    %37 = vector.broadcast %15 : vector<1x8xf32> to vector<8x8xf32>
    %38 = arith.addf %36, %37 : vector<8x8xf32>
    %39 = arith.truncf %38 : vector<8x8xf32> to vector<8x8xbf16>
    %c0_18 = arith.constant 0 : index
    %c0_19 = arith.constant 0 : index
    %40 = vector.load %arg15[%c0_18, %c0_19] : memref<8x32xbf16, #tpu.memory_space<vmem>>, vector<8x8xbf16>
    %cst_20 = arith.constant dense<0.000000e+00> : vector<8x8xf32>
    %41 = tpu.matmul %39, %40, %cst_20 {dimension_numbers = #tpu.dot_dimension_numbers<[1], [1], [0], [0], [0, 0, 1, 0], [], []>} : vector<8x8xbf16>, vector<8x8xbf16>, vector<8x8xf32> -> vector<8x8xf32>
    %cst_21 = arith.constant dense<0xFF800000> : vector<8xf32>
    %42 = vector.multi_reduction <maximumf>, %41, %cst_21 [1] : vector<8x8xf32> to vector<8xf32>
    %43 = vector.shape_cast %42 : vector<8xf32> to vector<8x1xf32>
    %44 = vector.broadcast %43 : vector<8x1xf32> to vector<8x8xf32>
    %45 = arith.subf %41, %44 : vector<8x8xf32>
    %46 = math.exp %45 : vector<8x8xf32>
    %cst_22 = arith.constant dense<0.000000e+00> : vector<8xf32>
    %47 = vector.multi_reduction <add>, %46, %cst_22 [1] : vector<8x8xf32> to vector<8xf32>
    %48 = vector.shape_cast %47 : vector<8xf32> to vector<8x1xf32>
    %49 = tpu.reciprocal %48 {approx = true} : vector<8x1xf32> -> vector<8x1xf32>
    %50 = vector.broadcast %49 : vector<8x1xf32> to vector<8x8xf32>
    %51 = arith.mulf %46, %50 : vector<8x8xf32>
    %52 = arith.truncf %51 : vector<8x8xf32> to vector<8x8xbf16>
    %c0_23 = arith.constant 0 : index
    %c0_24 = arith.constant 0 : index
    %53 = vector.load %arg16[%c0_23, %c0_24] : memref<8x32xbf16, #tpu.memory_space<vmem>>, vector<8x8xbf16>
    %cst_25 = arith.constant dense<0.000000e+00> : vector<8x8xf32>
    %54 = tpu.matmul %52, %53, %cst_25 {dimension_numbers = #tpu.dot_dimension_numbers<[1], [0], [0], [1], [0, 0, 1, 1], [], []>} : vector<8x8xbf16>, vector<8x8xbf16>, vector<8x8xf32> -> vector<8x8xf32>
    %55 = vector.extract_strided_slice %11 {offsets = [0, 8], sizes = [8, 8], strides = [1, 1]} : vector<8x32xf32> to vector<8x8xf32>
    %cst_26 = arith.constant dense<0.000000e+00> : vector<8xf32>
    %56 = vector.multi_reduction <add>, %55, %cst_26 [1] : vector<8x8xf32> to vector<8xf32>
    %57 = vector.shape_cast %56 : vector<8xf32> to vector<8x1xf32>
    %cst_27 = arith.constant 8.000000e+00 : f32
    %58 = vector.broadcast %cst_27 : f32 to vector<8x1xf32>
    %59 = arith.divf %57, %58 : vector<8x1xf32>
    %60 = vector.broadcast %59 : vector<8x1xf32> to vector<8x8xf32>
    %61 = arith.subf %55, %60 : vector<8x8xf32>
    %62 = arith.mulf %61, %61 : vector<8x8xf32>
    %cst_28 = arith.constant dense<0.000000e+00> : vector<8xf32>
    %63 = vector.multi_reduction <add>, %62, %cst_28 [1] : vector<8x8xf32> to vector<8xf32>
    %64 = vector.shape_cast %63 : vector<8xf32> to vector<8x1xf32>
    %cst_29 = arith.constant 8.000000e+00 : f32
    %65 = vector.broadcast %cst_29 : f32 to vector<8x1xf32>
    %66 = arith.divf %64, %65 : vector<8x1xf32>
    %67 = vector.broadcast %59 : vector<8x1xf32> to vector<8x8xf32>
    %68 = arith.subf %55, %67 : vector<8x8xf32>
    %cst_30 = arith.constant 9.99999974E-6 : f32
    %69 = vector.broadcast %cst_30 : f32 to vector<8x1xf32>
    %70 = arith.addf %66, %69 : vector<8x1xf32>
    %71 = math.rsqrt %70 : vector<8x1xf32>
    %72 = vector.broadcast %71 : vector<8x1xf32> to vector<8x8xf32>
    %73 = arith.mulf %68, %72 : vector<8x8xf32>
    %74 = vector.broadcast %13 : vector<1x8xf32> to vector<8x8xf32>
    %75 = arith.mulf %73, %74 : vector<8x8xf32>
    %76 = vector.broadcast %15 : vector<1x8xf32> to vector<8x8xf32>
    %77 = arith.addf %75, %76 : vector<8x8xf32>
    %78 = arith.truncf %77 : vector<8x8xf32> to vector<8x8xbf16>
    %c0_31 = arith.constant 0 : index
    %c8 = arith.constant 8 : index
    %79 = vector.load %arg15[%c0_31, %c8] : memref<8x32xbf16, #tpu.memory_space<vmem>>, vector<8x8xbf16>
    %cst_32 = arith.constant dense<0.000000e+00> : vector<8x8xf32>
    %80 = tpu.matmul %78, %79, %cst_32 {dimension_numbers = #tpu.dot_dimension_numbers<[1], [1], [0], [0], [0, 0, 1, 0], [], []>} : vector<8x8xbf16>, vector<8x8xbf16>, vector<8x8xf32> -> vector<8x8xf32>
    %cst_33 = arith.constant dense<0xFF800000> : vector<8xf32>
    %81 = vector.multi_reduction <maximumf>, %80, %cst_33 [1] : vector<8x8xf32> to vector<8xf32>
    %82 = vector.shape_cast %81 : vector<8xf32> to vector<8x1xf32>
    %83 = vector.broadcast %82 : vector<8x1xf32> to vector<8x8xf32>
    %84 = arith.subf %80, %83 : vector<8x8xf32>
    %85 = math.exp %84 : vector<8x8xf32>
    %cst_34 = arith.constant dense<0.000000e+00> : vector<8xf32>
    %86 = vector.multi_reduction <add>, %85, %cst_34 [1] : vector<8x8xf32> to vector<8xf32>
    %87 = vector.shape_cast %86 : vector<8xf32> to vector<8x1xf32>
    %88 = tpu.reciprocal %87 {approx = true} : vector<8x1xf32> -> vector<8x1xf32>
    %89 = vector.broadcast %88 : vector<8x1xf32> to vector<8x8xf32>
    %90 = arith.mulf %85, %89 : vector<8x8xf32>
    %91 = arith.truncf %90 : vector<8x8xf32> to vector<8x8xbf16>
    %c0_35 = arith.constant 0 : index
    %c8_36 = arith.constant 8 : index
    %92 = vector.load %arg16[%c0_35, %c8_36] : memref<8x32xbf16, #tpu.memory_space<vmem>>, vector<8x8xbf16>
    %cst_37 = arith.constant dense<0.000000e+00> : vector<8x8xf32>
    %93 = tpu.matmul %91, %92, %cst_37 {dimension_numbers = #tpu.dot_dimension_numbers<[1], [0], [0], [1], [0, 0, 1, 1], [], []>} : vector<8x8xbf16>, vector<8x8xbf16>, vector<8x8xf32> -> vector<8x8xf32>
    %94 = vector.extract_strided_slice %11 {offsets = [0, 16], sizes = [8, 8], strides = [1, 1]} : vector<8x32xf32> to vector<8x8xf32>
    %cst_38 = arith.constant dense<0.000000e+00> : vector<8xf32>
    %95 = vector.multi_reduction <add>, %94, %cst_38 [1] : vector<8x8xf32> to vector<8xf32>
    %96 = vector.shape_cast %95 : vector<8xf32> to vector<8x1xf32>
    %cst_39 = arith.constant 8.000000e+00 : f32
    %97 = vector.broadcast %cst_39 : f32 to vector<8x1xf32>
    %98 = arith.divf %96, %97 : vector<8x1xf32>
    %99 = vector.broadcast %98 : vector<8x1xf32> to vector<8x8xf32>
    %100 = arith.subf %94, %99 : vector<8x8xf32>
    %101 = arith.mulf %100, %100 : vector<8x8xf32>
    %cst_40 = arith.constant dense<0.000000e+00> : vector<8xf32>
    %102 = vector.multi_reduction <add>, %101, %cst_40 [1] : vector<8x8xf32> to vector<8xf32>
    %103 = vector.shape_cast %102 : vector<8xf32> to vector<8x1xf32>
    %cst_41 = arith.constant 8.000000e+00 : f32
    %104 = vector.broadcast %cst_41 : f32 to vector<8x1xf32>
    %105 = arith.divf %103, %104 : vector<8x1xf32>
    %106 = vector.broadcast %98 : vector<8x1xf32> to vector<8x8xf32>
    %107 = arith.subf %94, %106 : vector<8x8xf32>
    %cst_42 = arith.constant 9.99999974E-6 : f32
    %108 = vector.broadcast %cst_42 : f32 to vector<8x1xf32>
    %109 = arith.addf %105, %108 : vector<8x1xf32>
    %110 = math.rsqrt %109 : vector<8x1xf32>
    %111 = vector.broadcast %110 : vector<8x1xf32> to vector<8x8xf32>
    %112 = arith.mulf %107, %111 : vector<8x8xf32>
    %113 = vector.broadcast %13 : vector<1x8xf32> to vector<8x8xf32>
    %114 = arith.mulf %112, %113 : vector<8x8xf32>
    %115 = vector.broadcast %15 : vector<1x8xf32> to vector<8x8xf32>
    %116 = arith.addf %114, %115 : vector<8x8xf32>
    %117 = arith.truncf %116 : vector<8x8xf32> to vector<8x8xbf16>
    %c0_43 = arith.constant 0 : index
    %c16 = arith.constant 16 : index
    %118 = vector.load %arg15[%c0_43, %c16] : memref<8x32xbf16, #tpu.memory_space<vmem>>, vector<8x8xbf16>
    %cst_44 = arith.constant dense<0.000000e+00> : vector<8x8xf32>
    %119 = tpu.matmul %117, %118, %cst_44 {dimension_numbers = #tpu.dot_dimension_numbers<[1], [1], [0], [0], [0, 0, 1, 0], [], []>} : vector<8x8xbf16>, vector<8x8xbf16>, vector<8x8xf32> -> vector<8x8xf32>
    %cst_45 = arith.constant dense<0xFF800000> : vector<8xf32>
    %120 = vector.multi_reduction <maximumf>, %119, %cst_45 [1] : vector<8x8xf32> to vector<8xf32>
    %121 = vector.shape_cast %120 : vector<8xf32> to vector<8x1xf32>
    %122 = vector.broadcast %121 : vector<8x1xf32> to vector<8x8xf32>
    %123 = arith.subf %119, %122 : vector<8x8xf32>
    %124 = math.exp %123 : vector<8x8xf32>
    %cst_46 = arith.constant dense<0.000000e+00> : vector<8xf32>
    %125 = vector.multi_reduction <add>, %124, %cst_46 [1] : vector<8x8xf32> to vector<8xf32>
    %126 = vector.shape_cast %125 : vector<8xf32> to vector<8x1xf32>
    %127 = tpu.reciprocal %126 {approx = true} : vector<8x1xf32> -> vector<8x1xf32>
    %128 = vector.broadcast %127 : vector<8x1xf32> to vector<8x8xf32>
    %129 = arith.mulf %124, %128 : vector<8x8xf32>
    %130 = arith.truncf %129 : vector<8x8xf32> to vector<8x8xbf16>
    %c0_47 = arith.constant 0 : index
    %c16_48 = arith.constant 16 : index
    %131 = vector.load %arg16[%c0_47, %c16_48] : memref<8x32xbf16, #tpu.memory_space<vmem>>, vector<8x8xbf16>
    %cst_49 = arith.constant dense<0.000000e+00> : vector<8x8xf32>
    %132 = tpu.matmul %130, %131, %cst_49 {dimension_numbers = #tpu.dot_dimension_numbers<[1], [0], [0], [1], [0, 0, 1, 1], [], []>} : vector<8x8xbf16>, vector<8x8xbf16>, vector<8x8xf32> -> vector<8x8xf32>
    %133 = vector.extract_strided_slice %11 {offsets = [0, 24], sizes = [8, 8], strides = [1, 1]} : vector<8x32xf32> to vector<8x8xf32>
    %cst_50 = arith.constant dense<0.000000e+00> : vector<8xf32>
    %134 = vector.multi_reduction <add>, %133, %cst_50 [1] : vector<8x8xf32> to vector<8xf32>
    %135 = vector.shape_cast %134 : vector<8xf32> to vector<8x1xf32>
    %cst_51 = arith.constant 8.000000e+00 : f32
    %136 = vector.broadcast %cst_51 : f32 to vector<8x1xf32>
    %137 = arith.divf %135, %136 : vector<8x1xf32>
    %138 = vector.broadcast %137 : vector<8x1xf32> to vector<8x8xf32>
    %139 = arith.subf %133, %138 : vector<8x8xf32>
    %140 = arith.mulf %139, %139 : vector<8x8xf32>
    %cst_52 = arith.constant dense<0.000000e+00> : vector<8xf32>
    %141 = vector.multi_reduction <add>, %140, %cst_52 [1] : vector<8x8xf32> to vector<8xf32>
    %142 = vector.shape_cast %141 : vector<8xf32> to vector<8x1xf32>
    %cst_53 = arith.constant 8.000000e+00 : f32
    %143 = vector.broadcast %cst_53 : f32 to vector<8x1xf32>
    %144 = arith.divf %142, %143 : vector<8x1xf32>
    %145 = vector.broadcast %137 : vector<8x1xf32> to vector<8x8xf32>
    %146 = arith.subf %133, %145 : vector<8x8xf32>
    %cst_54 = arith.constant 9.99999974E-6 : f32
    %147 = vector.broadcast %cst_54 : f32 to vector<8x1xf32>
    %148 = arith.addf %144, %147 : vector<8x1xf32>
    %149 = math.rsqrt %148 : vector<8x1xf32>
    %150 = vector.broadcast %149 : vector<8x1xf32> to vector<8x8xf32>
    %151 = arith.mulf %146, %150 : vector<8x8xf32>
    %152 = vector.broadcast %13 : vector<1x8xf32> to vector<8x8xf32>
    %153 = arith.mulf %151, %152 : vector<8x8xf32>
    %154 = vector.broadcast %15 : vector<1x8xf32> to vector<8x8xf32>
    %155 = arith.addf %153, %154 : vector<8x8xf32>
    %156 = arith.truncf %155 : vector<8x8xf32> to vector<8x8xbf16>
    %c0_55 = arith.constant 0 : index
    %c24 = arith.constant 24 : index
    %157 = vector.load %arg15[%c0_55, %c24] : memref<8x32xbf16, #tpu.memory_space<vmem>>, vector<8x8xbf16>
    %cst_56 = arith.constant dense<0.000000e+00> : vector<8x8xf32>
    %158 = tpu.matmul %156, %157, %cst_56 {dimension_numbers = #tpu.dot_dimension_numbers<[1], [1], [0], [0], [0, 0, 1, 0], [], []>} : vector<8x8xbf16>, vector<8x8xbf16>, vector<8x8xf32> -> vector<8x8xf32>
    %cst_57 = arith.constant dense<0xFF800000> : vector<8xf32>
    %159 = vector.multi_reduction <maximumf>, %158, %cst_57 [1] : vector<8x8xf32> to vector<8xf32>
    %160 = vector.shape_cast %159 : vector<8xf32> to vector<8x1xf32>
    %161 = vector.broadcast %160 : vector<8x1xf32> to vector<8x8xf32>
    %162 = arith.subf %158, %161 : vector<8x8xf32>
    %163 = math.exp %162 : vector<8x8xf32>
    %cst_58 = arith.constant dense<0.000000e+00> : vector<8xf32>
    %164 = vector.multi_reduction <add>, %163, %cst_58 [1] : vector<8x8xf32> to vector<8xf32>
    %165 = vector.shape_cast %164 : vector<8xf32> to vector<8x1xf32>
    %166 = tpu.reciprocal %165 {approx = true} : vector<8x1xf32> -> vector<8x1xf32>
    %167 = vector.broadcast %166 : vector<8x1xf32> to vector<8x8xf32>
    %168 = arith.mulf %163, %167 : vector<8x8xf32>
    %169 = arith.truncf %168 : vector<8x8xf32> to vector<8x8xbf16>
    %c0_59 = arith.constant 0 : index
    %c24_60 = arith.constant 24 : index
    %170 = vector.load %arg16[%c0_59, %c24_60] : memref<8x32xbf16, #tpu.memory_space<vmem>>, vector<8x8xbf16>
    %cst_61 = arith.constant dense<0.000000e+00> : vector<8x8xf32>
    %171 = tpu.matmul %169, %170, %cst_61 {dimension_numbers = #tpu.dot_dimension_numbers<[1], [0], [0], [1], [0, 0, 1, 1], [], []>} : vector<8x8xbf16>, vector<8x8xbf16>, vector<8x8xf32> -> vector<8x8xf32>
    %172 = tpu.concatenate %54, %93, %132, %171 in 1 : vector<8x8xf32>, vector<8x8xf32>, vector<8x8xf32>, vector<8x8xf32> -> vector<8x32xf32>
    %173 = arith.truncf %172 : vector<8x32xf32> to vector<8x32xbf16>
    %c0_62 = arith.constant 0 : index
    %c0_63 = arith.constant 0 : index
    %174 = vector.load %arg7[%c0_62, %c0_63] : memref<32x32xbf16, #tpu.memory_space<vmem>>, vector<32x32xbf16>
    %cst_64 = arith.constant dense<0.000000e+00> : vector<8x32xf32>
    %175 = tpu.matmul %173, %174, %cst_64 {dimension_numbers = #tpu.dot_dimension_numbers<[1], [0], [0], [1], [0, 0, 1, 1], [], []>} : vector<8x32xbf16>, vector<32x32xbf16>, vector<8x32xf32> -> vector<8x32xf32>
    %c0_65 = arith.constant 0 : index
    %c0_66 = arith.constant 0 : index
    %c0_67 = arith.constant 0 : index
    %176 = vector.load %arg13[%c0_65, %c0_66, %c0_67] : memref<6x1x32xf32, #tpu.memory_space<vmem>>, vector<1x1x32xf32>
    %177 = vector.shape_cast %176 : vector<1x1x32xf32> to vector<1x32xf32>
    %178 = vector.broadcast %177 : vector<1x32xf32> to vector<8x32xf32>
    %179 = arith.addf %175, %178 : vector<8x32xf32>
    %c1_68 = arith.constant 1 : index
    %c0_69 = arith.constant 0 : index
    %c0_70 = arith.constant 0 : index
    %180 = vector.load %arg13[%c1_68, %c0_69, %c0_70] : memref<6x1x32xf32, #tpu.memory_space<vmem>>, vector<1x1x32xf32>
    %181 = vector.shape_cast %180 : vector<1x1x32xf32> to vector<1x32xf32>
    %c2 = arith.constant 2 : index
    %c0_71 = arith.constant 0 : index
    %c0_72 = arith.constant 0 : index
    %182 = vector.load %arg13[%c2, %c0_71, %c0_72] : memref<6x1x32xf32, #tpu.memory_space<vmem>>, vector<1x1x32xf32>
    %183 = vector.shape_cast %182 : vector<1x1x32xf32> to vector<1x32xf32>
    %cst_73 = arith.constant dense<0.000000e+00> : vector<8xf32>
    %184 = vector.multi_reduction <add>, %179, %cst_73 [1] : vector<8x32xf32> to vector<8xf32>
    %185 = vector.shape_cast %184 : vector<8xf32> to vector<8x1xf32>
    %cst_74 = arith.constant 3.200000e+01 : f32
    %186 = vector.broadcast %cst_74 : f32 to vector<8x1xf32>
    %187 = arith.divf %185, %186 : vector<8x1xf32>
    %188 = vector.broadcast %187 : vector<8x1xf32> to vector<8x32xf32>
    %189 = arith.subf %179, %188 : vector<8x32xf32>
    %190 = arith.mulf %189, %189 : vector<8x32xf32>
    %cst_75 = arith.constant dense<0.000000e+00> : vector<8xf32>
    %191 = vector.multi_reduction <add>, %190, %cst_75 [1] : vector<8x32xf32> to vector<8xf32>
    %192 = vector.shape_cast %191 : vector<8xf32> to vector<8x1xf32>
    %cst_76 = arith.constant 3.200000e+01 : f32
    %193 = vector.broadcast %cst_76 : f32 to vector<8x1xf32>
    %194 = arith.divf %192, %193 : vector<8x1xf32>
    %195 = vector.broadcast %187 : vector<8x1xf32> to vector<8x32xf32>
    %196 = arith.subf %179, %195 : vector<8x32xf32>
    %cst_77 = arith.constant 9.99999974E-6 : f32
    %197 = vector.broadcast %cst_77 : f32 to vector<8x1xf32>
    %198 = arith.addf %194, %197 : vector<8x1xf32>
    %199 = math.rsqrt %198 : vector<8x1xf32>
    %200 = vector.broadcast %199 : vector<8x1xf32> to vector<8x32xf32>
    %201 = arith.mulf %196, %200 : vector<8x32xf32>
    %202 = vector.broadcast %181 : vector<1x32xf32> to vector<8x32xf32>
    %203 = arith.mulf %201, %202 : vector<8x32xf32>
    %204 = vector.broadcast %183 : vector<1x32xf32> to vector<8x32xf32>
    %205 = arith.addf %203, %204 : vector<8x32xf32>
    %206 = arith.addf %4, %205 : vector<8x32xf32>
    %207 = arith.truncf %206 : vector<8x32xf32> to vector<8x32xbf16>
    %c0_78 = arith.constant 0 : index
    %c0_79 = arith.constant 0 : index
    %208 = vector.load %arg8[%c0_78, %c0_79] : memref<32x128xbf16, #tpu.memory_space<vmem>>, vector<32x128xbf16>
    %cst_80 = arith.constant dense<0.000000e+00> : vector<8x128xf32>
    %209 = tpu.matmul %207, %208, %cst_80 {dimension_numbers = #tpu.dot_dimension_numbers<[1], [0], [0], [1], [0, 0, 1, 1], [], []>} : vector<8x32xbf16>, vector<32x128xbf16>, vector<8x128xf32> -> vector<8x128xf32>
    %c0_81 = arith.constant 0 : index
    %c0_82 = arith.constant 0 : index
    %210 = vector.load %arg12[%c0_81, %c0_82] : memref<1x128xf32, #tpu.memory_space<vmem>>, vector<1x128xf32>
    %211 = vector.broadcast %210 : vector<1x128xf32> to vector<8x128xf32>
    %212 = arith.addf %209, %211 : vector<8x128xf32>
    %cst_83 = arith.constant 5.000000e-01 : f32
    %213 = vector.broadcast %cst_83 : f32 to vector<8x128xf32>
    %214 = arith.mulf %213, %212 : vector<8x128xf32>
    %cst_84 = arith.constant 0.707106769 : f32
    %215 = vector.broadcast %cst_84 : f32 to vector<8x128xf32>
    %216 = arith.mulf %212, %215 : vector<8x128xf32>
    %217 = math.absf %216 : vector<8x128xf32>
    %cst_85 = arith.constant 0.327591091 : f32
    %218 = vector.broadcast %cst_85 : f32 to vector<8x128xf32>
    %219 = arith.mulf %218, %217 : vector<8x128xf32>
    %cst_86 = arith.constant 1.000000e+00 : f32
    %220 = vector.broadcast %cst_86 : f32 to vector<8x128xf32>
    %221 = arith.addf %220, %219 : vector<8x128xf32>
    %cst_87 = arith.constant 1.000000e+00 : f32
    %222 = vector.broadcast %cst_87 : f32 to vector<8x128xf32>
    %223 = arith.divf %222, %221 : vector<8x128xf32>
    %cst_88 = arith.constant 1.06140542 : f32
    %224 = vector.broadcast %cst_88 : f32 to vector<8x128xf32>
    %225 = arith.mulf %224, %223 : vector<8x128xf32>
    %cst_89 = arith.constant -1.45315206 : f32
    %226 = vector.broadcast %cst_89 : f32 to vector<8x128xf32>
    %227 = arith.addf %225, %226 : vector<8x128xf32>
    %228 = arith.mulf %227, %223 : vector<8x128xf32>
    %cst_90 = arith.constant 1.42141378 : f32
    %229 = vector.broadcast %cst_90 : f32 to vector<8x128xf32>
    %230 = arith.addf %228, %229 : vector<8x128xf32>
    %231 = arith.mulf %230, %223 : vector<8x128xf32>
    %cst_91 = arith.constant -0.284496725 : f32
    %232 = vector.broadcast %cst_91 : f32 to vector<8x128xf32>
    %233 = arith.addf %231, %232 : vector<8x128xf32>
    %234 = arith.mulf %233, %223 : vector<8x128xf32>
    %cst_92 = arith.constant 0.254829586 : f32
    %235 = vector.broadcast %cst_92 : f32 to vector<8x128xf32>
    %236 = arith.addf %234, %235 : vector<8x128xf32>
    %237 = arith.mulf %236, %223 : vector<8x128xf32>
    %cst_93 = arith.constant 0.000000e+00 : f32
    %238 = vector.broadcast %cst_93 : f32 to vector<8x128xf32>
    %239 = arith.subf %238, %217 : vector<8x128xf32>
    %240 = arith.mulf %239, %217 : vector<8x128xf32>
    %241 = math.exp %240 : vector<8x128xf32>
    %242 = arith.mulf %237, %241 : vector<8x128xf32>
    %cst_94 = arith.constant 1.000000e+00 : f32
    %243 = vector.broadcast %cst_94 : f32 to vector<8x128xf32>
    %244 = arith.subf %243, %242 : vector<8x128xf32>
    %cst_95 = arith.constant 0.000000e+00 : f32
    %245 = vector.broadcast %cst_95 : f32 to vector<8x128xf32>
    %246 = arith.cmpf olt, %216, %245 : vector<8x128xf32>
    %cst_96 = arith.constant 0.000000e+00 : f32
    %247 = vector.broadcast %cst_96 : f32 to vector<8x128xf32>
    %248 = arith.subf %247, %244 : vector<8x128xf32>
    %249 = arith.select %246, %248, %244 : vector<8x128xi1>, vector<8x128xf32>
    %cst_97 = arith.constant 1.000000e+00 : f32
    %250 = vector.broadcast %cst_97 : f32 to vector<8x128xf32>
    %251 = arith.addf %250, %249 : vector<8x128xf32>
    %252 = arith.mulf %214, %251 : vector<8x128xf32>
    %253 = arith.truncf %252 : vector<8x128xf32> to vector<8x128xbf16>
    %c0_98 = arith.constant 0 : index
    %c0_99 = arith.constant 0 : index
    %254 = vector.load %arg9[%c0_98, %c0_99] : memref<128x32xbf16, #tpu.memory_space<vmem>>, vector<128x32xbf16>
    %cst_100 = arith.constant dense<0.000000e+00> : vector<8x32xf32>
    %255 = tpu.matmul %253, %254, %cst_100 {dimension_numbers = #tpu.dot_dimension_numbers<[1], [0], [0], [1], [0, 0, 1, 1], [], []>} : vector<8x128xbf16>, vector<128x32xbf16>, vector<8x32xf32> -> vector<8x32xf32>
    %c5 = arith.constant 5 : index
    %c0_101 = arith.constant 0 : index
    %c0_102 = arith.constant 0 : index
    %256 = vector.load %arg13[%c5, %c0_101, %c0_102] : memref<6x1x32xf32, #tpu.memory_space<vmem>>, vector<1x1x32xf32>
    %257 = vector.shape_cast %256 : vector<1x1x32xf32> to vector<1x32xf32>
    %258 = vector.broadcast %257 : vector<1x32xf32> to vector<8x32xf32>
    %259 = arith.addf %255, %258 : vector<8x32xf32>
    %c3 = arith.constant 3 : index
    %c0_103 = arith.constant 0 : index
    %c0_104 = arith.constant 0 : index
    %260 = vector.load %arg13[%c3, %c0_103, %c0_104] : memref<6x1x32xf32, #tpu.memory_space<vmem>>, vector<1x1x32xf32>
    %261 = vector.shape_cast %260 : vector<1x1x32xf32> to vector<1x32xf32>
    %c4 = arith.constant 4 : index
    %c0_105 = arith.constant 0 : index
    %c0_106 = arith.constant 0 : index
    %262 = vector.load %arg13[%c4, %c0_105, %c0_106] : memref<6x1x32xf32, #tpu.memory_space<vmem>>, vector<1x1x32xf32>
    %263 = vector.shape_cast %262 : vector<1x1x32xf32> to vector<1x32xf32>
    %cst_107 = arith.constant dense<0.000000e+00> : vector<8xf32>
    %264 = vector.multi_reduction <add>, %259, %cst_107 [1] : vector<8x32xf32> to vector<8xf32>
    %265 = vector.shape_cast %264 : vector<8xf32> to vector<8x1xf32>
    %cst_108 = arith.constant 3.200000e+01 : f32
    %266 = vector.broadcast %cst_108 : f32 to vector<8x1xf32>
    %267 = arith.divf %265, %266 : vector<8x1xf32>
    %268 = vector.broadcast %267 : vector<8x1xf32> to vector<8x32xf32>
    %269 = arith.subf %259, %268 : vector<8x32xf32>
    %270 = arith.mulf %269, %269 : vector<8x32xf32>
    %cst_109 = arith.constant dense<0.000000e+00> : vector<8xf32>
    %271 = vector.multi_reduction <add>, %270, %cst_109 [1] : vector<8x32xf32> to vector<8xf32>
    %272 = vector.shape_cast %271 : vector<8xf32> to vector<8x1xf32>
    %cst_110 = arith.constant 3.200000e+01 : f32
    %273 = vector.broadcast %cst_110 : f32 to vector<8x1xf32>
    %274 = arith.divf %272, %273 : vector<8x1xf32>
    %275 = vector.broadcast %267 : vector<8x1xf32> to vector<8x32xf32>
    %276 = arith.subf %259, %275 : vector<8x32xf32>
    %cst_111 = arith.constant 9.99999974E-6 : f32
    %277 = vector.broadcast %cst_111 : f32 to vector<8x1xf32>
    %278 = arith.addf %274, %277 : vector<8x1xf32>
    %279 = math.rsqrt %278 : vector<8x1xf32>
    %280 = vector.broadcast %279 : vector<8x1xf32> to vector<8x32xf32>
    %281 = arith.mulf %276, %280 : vector<8x32xf32>
    %282 = vector.broadcast %261 : vector<1x32xf32> to vector<8x32xf32>
    %283 = arith.mulf %281, %282 : vector<8x32xf32>
    %284 = vector.broadcast %263 : vector<1x32xf32> to vector<8x32xf32>
    %285 = arith.addf %283, %284 : vector<8x32xf32>
    %286 = arith.addf %206, %285 : vector<8x32xf32>
    %c0_112 = arith.constant 0 : index
    %c0_113 = arith.constant 0 : index
    %c0_114 = arith.constant 0 : index
    %287 = vector.load %arg14[%c0_112, %c0_113, %c0_114] : memref<1x8x32xf32, #tpu.memory_space<vmem>>, vector<1x8x32xf32>
    %288 = vector.shape_cast %287 : vector<1x8x32xf32> to vector<8x32xf32>
    %289 = vector.shape_cast %286 : vector<8x32xf32> to vector<1x8x32xf32>
    tpu.vector_store %arg14[%c0_112, %c0_113, %c0_114], %289 {strides = array<i32>} : memref<1x8x32xf32, #tpu.memory_space<vmem>>, vector<1x8x32xf32>,
    return
  }
  func.func @transform_0(%arg0: i32, %arg1: i32) -> (i32, i32, i32) {
    %c0_i32 = arith.constant 0 : i32
    %c0_i32_0 = arith.constant 0 : i32
    return %arg0, %arg1, %c0_i32 : i32, i32, i32
  }
  func.func @transform_1(%arg0: i32, %arg1: i32) -> (i32, i32, i32) {
    %c0_i32 = arith.constant 0 : i32
    %c0_i32_0 = arith.constant 0 : i32
    %c0_i32_1 = arith.constant 0 : i32
    return %arg0, %c0_i32, %c0_i32_0 : i32, i32, i32
  }
  func.func @transform_2(%arg0: i32, %arg1: i32) -> (i32, i32) {
    %c0_i32 = arith.constant 0 : i32
    %c0_i32_0 = arith.constant 0 : i32
    %c0_i32_1 = arith.constant 0 : i32
    return %c0_i32, %c0_i32_0 : i32, i32
  }
  func.func @transform_3(%arg0: i32, %arg1: i32) -> (i32, i32) {
    %c0_i32 = arith.constant 0 : i32
    %c0_i32_0 = arith.constant 0 : i32
    %c0_i32_1 = arith.constant 0 : i32
    return %c0_i32, %c0_i32_0 : i32, i32
  }
  func.func @transform_4(%arg0: i32, %arg1: i32) -> (i32, i32) {
    %c0_i32 = arith.constant 0 : i32
    %c0_i32_0 = arith.constant 0 : i32
    %c0_i32_1 = arith.constant 0 : i32
    return %c0_i32, %c0_i32_0 : i32, i32
  }
  func.func @transform_5(%arg0: i32, %arg1: i32) -> (i32, i32) {
    %c0_i32 = arith.constant 0 : i32
    %c0_i32_0 = arith.constant 0 : i32
    %c0_i32_1 = arith.constant 0 : i32
    return %c0_i32, %c0_i32_0 : i32, i32
  }
  func.func @transform_6(%arg0: i32, %arg1: i32) -> (i32, i32) {
    %c0_i32 = arith.constant 0 : i32
    %c0_i32_0 = arith.constant 0 : i32
    %c0_i32_1 = arith.constant 0 : i32
    return %c0_i32, %c0_i32_0 : i32, i32
  }
  func.func @transform_7(%arg0: i32, %arg1: i32) -> (i32, i32) {
    %c0_i32 = arith.constant 0 : i32
    %c0_i32_0 = arith.constant 0 : i32
    %c0_i32_1 = arith.constant 0 : i32
    return %c0_i32, %c0_i32_0 : i32, i32
  }
  func.func @transform_8(%arg0: i32, %arg1: i32) -> (i32, i32, i32) {
    %c0_i32 = arith.constant 0 : i32
    %c0_i32_0 = arith.constant 0 : i32
    %c0_i32_1 = arith.constant 0 : i32
    %c0_i32_2 = arith.constant 0 : i32
    return %c0_i32, %c0_i32_0, %c0_i32_1 : i32, i32, i32
  }
  func.func @transform_9(%arg0: i32, %arg1: i32) -> (i32, i32, i32) {
    %c0_i32 = arith.constant 0 : i32
    %c0_i32_0 = arith.constant 0 : i32
    %c0_i32_1 = arith.constant 0 : i32
    %c0_i32_2 = arith.constant 0 : i32
    return %c0_i32, %c0_i32_0, %c0_i32_1 : i32, i32, i32
  }
  func.func @transform_10(%arg0: i32, %arg1: i32) -> (i32, i32) {
    %c0_i32 = arith.constant 0 : i32
    %c0_i32_0 = arith.constant 0 : i32
    %c0_i32_1 = arith.constant 0 : i32
    return %c0_i32, %c0_i32_0 : i32, i32
  }
  func.func @transform_11(%arg0: i32, %arg1: i32) -> (i32, i32, i32) {
    %c0_i32 = arith.constant 0 : i32
    %c0_i32_0 = arith.constant 0 : i32
    %c0_i32_1 = arith.constant 0 : i32
    %c0_i32_2 = arith.constant 0 : i32
    return %c0_i32, %c0_i32_0, %c0_i32_1 : i32, i32, i32
  }
  func.func @transform_12(%arg0: i32, %arg1: i32) -> (i32, i32, i32) {
    %c0_i32 = arith.constant 0 : i32
    %c0_i32_0 = arith.constant 0 : i32
    return %arg0, %arg1, %c0_i32 : i32, i32, i32
  }
}

</mosaic_0001>

<llo_original>
// kernel: tpu_custom_call.1
$region0: #{tpu_custom_call.1}
  #allocation0 [shape = 'u32[]', space=smem, size = 0x4, offset = 0x4, fixed_abs, tag = 'smem constant byte address 0x4 - core index']
  #allocation1 [shape = 'u32[144,128]{1,0:T(1,128)}', space=vmem, size = 0x12000, scoped, tag = 'internal scratch']
  #allocation2 [shape = 'bf16[8,32]{1,0:T(8,128)(2,1)}', space=vmem, size = 0x800, scoped, tag = 'scratch operand']
  #allocation3 [shape = 'bf16[8,32]{1,0:T(8,128)(2,1)}', space=vmem, size = 0x800, scoped, tag = 'scratch operand']
  %s0 = inlined_call_operand.vmem [shape: f32[2,8,32], index: 0, kind: input, shape index: {}]
  %s1 = inlined_call_operand.hbm [shape: bf16[2,8,32], index: 1, kind: input, shape index: {}]
  %s2 = inlined_call_operand.vmem [shape: bf16[32,32], index: 2, kind: input, shape index: {}]
  %s3 = inlined_call_operand.vmem [shape: bf16[32,32], index: 3, kind: input, shape index: {}]
  %s4 = inlined_call_operand.vmem [shape: bf16[32,32], index: 4, kind: input, shape index: {}]
  %s5 = inlined_call_operand.vmem [shape: bf16[32,32], index: 5, kind: input, shape index: {}]
  %s6 = inlined_call_operand.hbm [shape: bf16[32,128], index: 6, kind: input, shape index: {}]
  %s7 = inlined_call_operand.vmem [shape: bf16[128,32], index: 7, kind: input, shape index: {}]
  %s8 = inlined_call_operand.vmem [shape: f32[3,1,32], index: 8, kind: input, shape index: {}]
  %s9 = inlined_call_operand.vmem [shape: f32[4,1,8], index: 9, kind: input, shape index: {}]
  %s10 = inlined_call_operand.vmem [shape: f32[1,128], index: 10, kind: input, shape index: {}]
  %s11 = inlined_call_operand.vmem [shape: f32[6,1,32], index: 11, kind: input, shape index: {}]
  %s12 = inlined_call_operand.hbm [shape: f32[2,8,32], index: 12, kind: output, shape index: {}]
  %s13 = sld [smem:[#allocation0]]
  $region93: #{tpu_custom_call.1} parent=0
    _
  %s15 = ssub.s32 1, %s13
  %s16 = scalar_select 0, %s15, %s13
  $region1: #{tpu_custom_call.1} parent=0
    #allocation4 [shape = 'u8[4096]{0}', space=vmem, size = 0x1000, scoped, tag = 'input window, operand 1']
    #allocation5 [shape = 's32[2]{0}', space=sflag, size = 0x8, scoped, tag = 'scoped memory for tpu_custom_call.1']
    #allocation6 [shape = 's32[2]{0}', space=sflag, size = 0x8, scoped, tag = 'scoped memory for tpu_custom_call.1']
    #allocation7 [shape = 'u8[8192]{0}', space=vmem, size = 0x2000, scoped, tag = 'input window, operand 6, single buffered']
    #allocation8 [shape = 's32[1]{0}', space=sflag, size = 0x4, scoped, tag = 'scoped memory for tpu_custom_call.1']
    #allocation9 [shape = 'u8[8192]{0}', space=vmem, size = 0x2000, scoped, tag = 'output window, operand 0']
    %17 = vsyncpa [#allocation5], 0
    %s18 = scalar_lea.sflag [#allocation5], 1
    %19 = vsyncpa %s18, 0
    %20 = vsyncpa [#allocation8], 0
    %21 = vsyncpa [#allocation6], 0
    %s22 = scalar_lea.sflag [#allocation6], 1
    %23 = vsyncpa %s22, 0
    loop: start=0, step=1, limit=4
    $region2: #{tpu_custom_call.1} parent=1 // loop_pre_header
      _
    $region3: #{tpu_custom_call.1} parent=1 // loop_header
      %s25 = sphi 0, %s29
      %p26 = scmp.ge.s32.totalorder %s25, 4
      %s32 = sphi 0, %s44
      %s33 = sphi 0, %s40
      %s34 = sphi 0, %s32
      %s35 = sphi 0, %s33
      %s36 = sphi 0, %s34
      %s37 = sphi 0, %s35
      %s49 = sphi 0, %s51
      %s52 = sphi 0, %s49
      %s53 = sphi 0, %s52
      %s69 = sphi 0, %s53
      %s75 = sphi 0, %s77
      %s78 = sphi 0, %s75
      %s79 = sphi 0, %s78
      %s95 = sphi 0, %s79
      %s99 = sphi 0, %s99
      %s101 = sphi 0, %s99
      %s102 = sphi 0, %s101
      %s116 = sphi 0, %s102
      %s120 = sphi 0, %s120
      %s122 = sphi 0, %s120
      %s123 = sphi 0, %s122
      %s137 = sphi 0, %s123
      %s141 = sphi 0, %s141
      %s143 = sphi 0, %s141
      %s144 = sphi 0, %s143
      %s158 = sphi 0, %s144
      %s162 = sphi 0, %s162
      %s164 = sphi 0, %s162
      %s165 = sphi 0, %s164
      %s179 = sphi 0, %s165
      %s183 = sphi 0, %s183
      %s185 = sphi 0, %s183
      %s186 = sphi 0, %s185
      %s200 = sphi 0, %s186
      %s204 = sphi 0, %s204
      %s206 = sphi 0, %s204
      %s207 = sphi 0, %s206
      %s221 = sphi 0, %s207
      %s225 = sphi 0, %s225
      %s227 = sphi 0, %s225
      %s228 = sphi 0, %s227
      %s242 = sphi 0, %s228
      %s246 = sphi 0, %s246
      %s248 = sphi 0, %s246
      %s249 = sphi 0, %s248
      %s263 = sphi 0, %s249
      %s267 = sphi 0, %s267
      %s269 = sphi 0, %s267
      %s270 = sphi 0, %s269
      %s284 = sphi 0, %s270
      %s288 = sphi 0, %s288
      %s290 = sphi 0, %s288
      %s291 = sphi 0, %s290
      %s305 = sphi 0, %s291
      %s313 = sphi 0, %s315
      %s316 = sphi 0, %s313
      %s317 = sphi 0, %s316
      %s333 = sphi 0, %s317
    $region4: #{tpu_custom_call.1} parent=1 // loop_header_branch
      %28 = sbr.rel (%p26) target = $region8
    $region5: #{tpu_custom_call.1} parent=1 // loop_body
      %s30 = ssub.s32 %s25, 1
      %s31 = ssub.s32 %s25, 2
      %s38 = sadd.s32 1, %s33
      %p39 = scmp.ge.s32.totalorder %s38, 1
      %s40 = scalar_select %p39, 0, %s38
      %s41 = sadd.s32 1, %s32
      %s42 = scalar_select %p39, %s41, %s32
      %p43 = scmp.ge.s32.totalorder %s42, 2
      %s44 = scalar_select %p43, 0, %s42
      %s45 = ssub.s32 %s32, %s44
      %s46 = ssub.s32 %s33, %s40
      %s47 = sor.u32 %s45, %s46
      %p48 = scmp.eq.s32.totalorder %s47, 0
      %s50 = sadd.s32 %s49, 1
      %s51 = scalar_select %p48, %s49, %s50
      %p54 = pneg %p48
      %p55 = scmp.eq.s32.totalorder %s25, 1
      %p56 = por %p54, %p55
      %p57 = scmp.ne.s32.totalorder %s49, %s52
      %p58 = scmp.eq.s32.totalorder %s25, 0
      %p59 = por %p57, %p58
      %p60 = scmp.ne.s32.totalorder %s49, %s52
      %p61 = scmp.eq.s32.totalorder %s30, 1
      %p62 = por %p60, %p61
      %p63 = scmp.ne.s32.totalorder %s52, %s53
      %p64 = scmp.eq.s32.totalorder %s30, 0
      %p65 = por %p63, %p64
      %p66 = scmp.ne.s32.totalorder %s52, %s53
      %p67 = scmp.eq.s32.totalorder %s31, 1
      %p68 = por %p66, %p67
      %p70 = scmp.ne.s32.totalorder %s53, %s69
      %p71 = scmp.eq.s32.totalorder %s31, 0
      %p72 = por %p70, %p71
      %s73 = ssub.s32 %s32, %s44
      %p74 = scmp.eq.s32.totalorder %s73, 0
      %s76 = sadd.s32 %s75, 1
      %s77 = scalar_select %p74, %s75, %s76
      %p80 = pneg %p74
      %p81 = scmp.eq.s32.totalorder %s25, 1
      %p82 = por %p80, %p81
      %p83 = scmp.ne.s32.totalorder %s75, %s78
      %p84 = scmp.eq.s32.totalorder %s25, 0
      %p85 = por %p83, %p84
      %p86 = scmp.ne.s32.totalorder %s75, %s78
      %p87 = scmp.eq.s32.totalorder %s30, 1
      %p88 = por %p86, %p87
      %p89 = scmp.ne.s32.totalorder %s78, %s79
      %p90 = scmp.eq.s32.totalorder %s30, 0
      %p91 = por %p89, %p90
      %p92 = scmp.ne.s32.totalorder %s78, %s79
      %p93 = scmp.eq.s32.totalorder %s31, 1
      %p94 = por %p92, %p93
      %p96 = scmp.ne.s32.totalorder %s79, %s95
      %p97 = scmp.eq.s32.totalorder %s31, 0
      %p98 = por %p96, %p97
      %s100 = sadd.s32 %s99, 1
      %p103 = scmp.eq.s32.totalorder %s25, 1
      %p104 = scmp.ne.s32.totalorder %s99, %s101
      %p105 = scmp.eq.s32.totalorder %s25, 0
      %p106 = por %p104, %p105
      %p107 = scmp.ne.s32.totalorder %s99, %s101
      %p108 = scmp.eq.s32.totalorder %s30, 1
      %p109 = por %p107, %p108
      %p110 = scmp.ne.s32.totalorder %s101, %s102
      %p111 = scmp.eq.s32.totalorder %s30, 0
      %p112 = por %p110, %p111
      %p113 = scmp.ne.s32.totalorder %s101, %s102
      %p114 = scmp.eq.s32.totalorder %s31, 1
      %p115 = por %p113, %p114
      %p117 = scmp.ne.s32.totalorder %s102, %s116
      %p118 = scmp.eq.s32.totalorder %s31, 0
      %p119 = por %p117, %p118
      %s121 = sadd.s32 %s120, 1
      %p124 = scmp.eq.s32.totalorder %s25, 1
      %p125 = scmp.ne.s32.totalorder %s120, %s122
      %p126 = scmp.eq.s32.totalorder %s25, 0
      %p127 = por %p125, %p126
      %p128 = scmp.ne.s32.totalorder %s120, %s122
      %p129 = scmp.eq.s32.totalorder %s30, 1
      %p130 = por %p128, %p129
      %p131 = scmp.ne.s32.totalorder %s122, %s123
      %p132 = scmp.eq.s32.totalorder %s30, 0
      %p133 = por %p131, %p132
      %p134 = scmp.ne.s32.totalorder %s122, %s123
      %p135 = scmp.eq.s32.totalorder %s31, 1
      %p136 = por %p134, %p135
      %p138 = scmp.ne.s32.totalorder %s123, %s137
      %p139 = scmp.eq.s32.totalorder %s31, 0
      %p140 = por %p138, %p139
      %s142 = sadd.s32 %s141, 1
      %p145 = scmp.eq.s32.totalorder %s25, 1
      %p146 = scmp.ne.s32.totalorder %s141, %s143
      %p147 = scmp.eq.s32.totalorder %s25, 0
      %p148 = por %p146, %p147
      %p149 = scmp.ne.s32.totalorder %s141, %s143
      %p150 = scmp.eq.s32.totalorder %s30, 1
      %p151 = por %p149, %p150
      %p152 = scmp.ne.s32.totalorder %s143, %s144
      %p153 = scmp.eq.s32.totalorder %s30, 0
      %p154 = por %p152, %p153
      %p155 = scmp.ne.s32.totalorder %s143, %s144
      %p156 = scmp.eq.s32.totalorder %s31, 1
      %p157 = por %p155, %p156
      %p159 = scmp.ne.s32.totalorder %s144, %s158
      %p160 = scmp.eq.s32.totalorder %s31, 0
      %p161 = por %p159, %p160
      %s163 = sadd.s32 %s162, 1
      %p166 = scmp.eq.s32.totalorder %s25, 1
      %p167 = scmp.ne.s32.totalorder %s162, %s164
      %p168 = scmp.eq.s32.totalorder %s25, 0
      %p169 = por %p167, %p168
      %p170 = scmp.ne.s32.totalorder %s162, %s164
      %p171 = scmp.eq.s32.totalorder %s30, 1
      %p172 = por %p170, %p171
      %p173 = scmp.ne.s32.totalorder %s164, %s165
      %p174 = scmp.eq.s32.totalorder %s30, 0
      %p175 = por %p173, %p174
      %p176 = scmp.ne.s32.totalorder %s164, %s165
      %p177 = scmp.eq.s32.totalorder %s31, 1
      %p178 = por %p176, %p177
      %p180 = scmp.ne.s32.totalorder %s165, %s179
      %p181 = scmp.eq.s32.totalorder %s31, 0
      %p182 = por %p180, %p181
      %s184 = sadd.s32 %s183, 1
      %p187 = scmp.eq.s32.totalorder %s25, 1
      %p188 = scmp.ne.s32.totalorder %s183, %s185
      %p189 = scmp.eq.s32.totalorder %s25, 0
      %p190 = por %p188, %p189
      %p191 = scmp.ne.s32.totalorder %s183, %s185
      %p192 = scmp.eq.s32.totalorder %s30, 1
      %p193 = por %p191, %p192
      %p194 = scmp.ne.s32.totalorder %s185, %s186
      %p195 = scmp.eq.s32.totalorder %s30, 0
      %p196 = por %p194, %p195
      %p197 = scmp.ne.s32.totalorder %s185, %s186
      %p198 = scmp.eq.s32.totalorder %s31, 1
      %p199 = por %p197, %p198
      %p201 = scmp.ne.s32.totalorder %s186, %s200
      %p202 = scmp.eq.s32.totalorder %s31, 0
      %p203 = por %p201, %p202
      %s205 = sadd.s32 %s204, 1
      %p208 = scmp.eq.s32.totalorder %s25, 1
      %p209 = scmp.ne.s32.totalorder %s204, %s206
      %p210 = scmp.eq.s32.totalorder %s25, 0
      %p211 = por %p209, %p210
      %p212 = scmp.ne.s32.totalorder %s204, %s206
      %p213 = scmp.eq.s32.totalorder %s30, 1
      %p214 = por %p212, %p213
      %p215 = scmp.ne.s32.totalorder %s206, %s207
      %p216 = scmp.eq.s32.totalorder %s30, 0
      %p217 = por %p215, %p216
      %p218 = scmp.ne.s32.totalorder %s206, %s207
      %p219 = scmp.eq.s32.totalorder %s31, 1
      %p220 = por %p218, %p219
      %p222 = scmp.ne.s32.totalorder %s207, %s221
      %p223 = scmp.eq.s32.totalorder %s31, 0
      %p224 = por %p222, %p223
      %s226 = sadd.s32 %s225, 1
      %p229 = scmp.eq.s32.totalorder %s25, 1
      %p230 = scmp.ne.s32.totalorder %s225, %s227
      %p231 = scmp.eq.s32.totalorder %s25, 0
      %p232 = por %p230, %p231
      %p233 = scmp.ne.s32.totalorder %s225, %s227
      %p234 = scmp.eq.s32.totalorder %s30, 1
      %p235 = por %p233, %p234
      %p236 = scmp.ne.s32.totalorder %s227, %s228
      %p237 = scmp.eq.s32.totalorder %s30, 0
      %p238 = por %p236, %p237
      %p239 = scmp.ne.s32.totalorder %s227, %s228
      %p240 = scmp.eq.s32.totalorder %s31, 1
      %p241 = por %p239, %p240
      %p243 = scmp.ne.s32.totalorder %s228, %s242
      %p244 = scmp.eq.s32.totalorder %s31, 0
      %p245 = por %p243, %p244
      %s247 = sadd.s32 %s246, 1
      %p250 = scmp.eq.s32.totalorder %s25, 1
      %p251 = scmp.ne.s32.totalorder %s246, %s248
      %p252 = scmp.eq.s32.totalorder %s25, 0
      %p253 = por %p251, %p252
      %p254 = scmp.ne.s32.totalorder %s246, %s248
      %p255 = scmp.eq.s32.totalorder %s30, 1
      %p256 = por %p254, %p255
      %p257 = scmp.ne.s32.totalorder %s248, %s249
      %p258 = scmp.eq.s32.totalorder %s30, 0
      %p259 = por %p257, %p258
      %p260 = scmp.ne.s32.totalorder %s248, %s249
      %p261 = scmp.eq.s32.totalorder %s31, 1
      %p262 = por %p260, %p261
      %p264 = scmp.ne.s32.totalorder %s249, %s263
      %p265 = scmp.eq.s32.totalorder %s31, 0
      %p266 = por %p264, %p265
      %s268 = sadd.s32 %s267, 1
      %p271 = scmp.eq.s32.totalorder %s25, 1
      %p272 = scmp.ne.s32.totalorder %s267, %s269
      %p273 = scmp.eq.s32.totalorder %s25, 0
      %p274 = por %p272, %p273
      %p275 = scmp.ne.s32.totalorder %s267, %s269
      %p276 = scmp.eq.s32.totalorder %s30, 1
      %p277 = por %p275, %p276
      %p278 = scmp.ne.s32.totalorder %s269, %s270
      %p279 = scmp.eq.s32.totalorder %s30, 0
      %p280 = por %p278, %p279
      %p281 = scmp.ne.s32.totalorder %s269, %s270
      %p282 = scmp.eq.s32.totalorder %s31, 1
      %p283 = por %p281, %p282
      %p285 = scmp.ne.s32.totalorder %s270, %s284
      %p286 = scmp.eq.s32.totalorder %s31, 0
      %p287 = por %p285, %p286
      %s289 = sadd.s32 %s288, 1
      %p292 = scmp.eq.s32.totalorder %s25, 1
      %p293 = scmp.ne.s32.totalorder %s288, %s290
      %p294 = scmp.eq.s32.totalorder %s25, 0
      %p295 = por %p293, %p294
      %p296 = scmp.ne.s32.totalorder %s288, %s290
      %p297 = scmp.eq.s32.totalorder %s30, 1
      %p298 = por %p296, %p297
      %p299 = scmp.ne.s32.totalorder %s290, %s291
      %p300 = scmp.eq.s32.totalorder %s30, 0
      %p301 = por %p299, %p300
      %p302 = scmp.ne.s32.totalorder %s290, %s291
      %p303 = scmp.eq.s32.totalorder %s31, 1
      %p304 = por %p302, %p303
      %p306 = scmp.ne.s32.totalorder %s291, %s305
      %p307 = scmp.eq.s32.totalorder %s31, 0
      %p308 = por %p306, %p307
      %s309 = ssub.s32 %s32, %s44
      %s310 = ssub.s32 %s33, %s40
      %s311 = sor.u32 %s309, %s310
      %p312 = scmp.eq.s32.totalorder %s311, 0
      %s314 = sadd.s32 %s313, 1
      %s315 = scalar_select %p312, %s313, %s314
      %p318 = pneg %p312
      %p319 = scmp.eq.s32.totalorder %s25, 1
      %p320 = por %p318, %p319
      %p321 = scmp.ne.s32.totalorder %s313, %s316
      %p322 = scmp.eq.s32.totalorder %s25, 0
      %p323 = por %p321, %p322
      %p324 = scmp.ne.s32.totalorder %s313, %s316
      %p325 = scmp.eq.s32.totalorder %s30, 1
      %p326 = por %p324, %p325
      %p327 = scmp.ne.s32.totalorder %s316, %s317
      %p328 = scmp.eq.s32.totalorder %s30, 0
      %p329 = por %p327, %p328
      %p330 = scmp.ne.s32.totalorder %s316, %s317
      %p331 = scmp.eq.s32.totalorder %s31, 1
      %p332 = por %p330, %p331
      %p334 = scmp.ne.s32.totalorder %s317, %s333
      %p335 = scmp.eq.s32.totalorder %s31, 0
      %p336 = por %p334, %p335
      %p337 = scmp.le.s32.totalorder 1, %s25
      %p338 = scmp.lt.s32.totalorder %s25, 3
      %p339 = pnand %p337, %p338
      %p340 = pneg %p339
      // Predicated region
      $region9: #{tpu_custom_call.1} parent=5 // pred_check
        _
      $region10: #{tpu_custom_call.1} parent=5 // pred_check_branch
        %342 = sbr.rel (%p339) target = $region12
      $region11: #{tpu_custom_call.1} parent=5 // pred_region
        %s343 = ssub.s32 %s25, 1
        // Predicated region
        $region13: #{tpu_custom_call.1} parent=11 // pred_check
          %p344 = pneg %p112
        $region14: #{tpu_custom_call.1} parent=11 // pred_check_branch
          %346 = sbr.rel (%p344) target = $region16
        $region15: #{tpu_custom_call.1} parent=11 // pred_region
          _
        $region16: #{tpu_custom_call.1} parent=11 // pred_fallthru
          _
        // Predicated region
        $region17: #{tpu_custom_call.1} parent=11 // pred_check
          %p347 = pneg %p133
        $region18: #{tpu_custom_call.1} parent=11 // pred_check_branch
          %349 = sbr.rel (%p347) target = $region20
        $region19: #{tpu_custom_call.1} parent=11 // pred_region
          _
        $region20: #{tpu_custom_call.1} parent=11 // pred_fallthru
          _
        // Predicated region
        $region21: #{tpu_custom_call.1} parent=11 // pred_check
          %p350 = pneg %p154
        $region22: #{tpu_custom_call.1} parent=11 // pred_check_branch
          %352 = sbr.rel (%p350) target = $region24
        $region23: #{tpu_custom_call.1} parent=11 // pred_region
          _
        $region24: #{tpu_custom_call.1} parent=11 // pred_fallthru
          _
        // Predicated region
        $region25: #{tpu_custom_call.1} parent=11 // pred_check
          %p353 = pneg %p175
        $region26: #{tpu_custom_call.1} parent=11 // pred_check_branch
          %355 = sbr.rel (%p353) target = $region28
        $region27: #{tpu_custom_call.1} parent=11 // pred_region
          _
        $region28: #{tpu_custom_call.1} parent=11 // pred_fallthru
          _
        // Predicated region
        $region29: #{tpu_custom_call.1} parent=11 // pred_check
          %p356 = pneg %p196
        $region30: #{tpu_custom_call.1} parent=11 // pred_check_branch
          %358 = sbr.rel (%p356) target = $region32
        $region31: #{tpu_custom_call.1} parent=11 // pred_region
          %s360 = ssub.s32 256, 256
          %361 = vsyncadd [#allocation8], %s360
          %s362 = sshll.u32 [#allocation7], 4
          %s363 = int_to_ptr.vmem [resolvable:$true] %s362
          %368 = dma.hbm_to_vmem [thread:$0]  %s6, 256, %s363, [#allocation8], 64, 64, 4
        $region32: #{tpu_custom_call.1} parent=11 // pred_fallthru
          _
        // Predicated region
        $region33: #{tpu_custom_call.1} parent=11 // pred_check
          %p369 = pneg %p217
        $region34: #{tpu_custom_call.1} parent=11 // pred_check_branch
          %371 = sbr.rel (%p369) target = $region36
        $region35: #{tpu_custom_call.1} parent=11 // pred_region
          _
        $region36: #{tpu_custom_call.1} parent=11 // pred_fallthru
          _
        // Predicated region
        $region37: #{tpu_custom_call.1} parent=11 // pred_check
          %p372 = pneg %p238
        $region38: #{tpu_custom_call.1} parent=11 // pred_check_branch
          %374 = sbr.rel (%p372) target = $region40
        $region39: #{tpu_custom_call.1} parent=11 // pred_region
          _
        $region40: #{tpu_custom_call.1} parent=11 // pred_fallthru
          _
        // Predicated region
        $region41: #{tpu_custom_call.1} parent=11 // pred_check
          %p375 = pneg %p259
        $region42: #{tpu_custom_call.1} parent=11 // pred_check_branch
          %377 = sbr.rel (%p375) target = $region44
        $region43: #{tpu_custom_call.1} parent=11 // pred_region
          _
        $region44: #{tpu_custom_call.1} parent=11 // pred_fallthru
          _
        // Predicated region
        $region45: #{tpu_custom_call.1} parent=11 // pred_check
          %p378 = pneg %p280
        $region46: #{tpu_custom_call.1} parent=11 // pred_check_branch
          %380 = sbr.rel (%p378) target = $region48
        $region47: #{tpu_custom_call.1} parent=11 // pred_region
          _
        $region48: #{tpu_custom_call.1} parent=11 // pred_fallthru
          _
        // Predicated region
        $region49: #{tpu_custom_call.1} parent=11 // pred_check
          %p381 = pneg %p301
        $region50: #{tpu_custom_call.1} parent=11 // pred_check_branch
          %383 = sbr.rel (%p381) target = $region52
        $region51: #{tpu_custom_call.1} parent=11 // pred_region
          _
        $region52: #{tpu_custom_call.1} parent=11 // pred_fallthru
          _
      $region12: #{tpu_custom_call.1} parent=5 // pred_fallthru
        _
      %p384 = scmp.lt.s32.totalorder %s25, 2
      // Predicated region
      $region53: #{tpu_custom_call.1} parent=5 // pred_check
        %p385 = pneg %p384
      $region54: #{tpu_custom_call.1} parent=5 // pred_check_branch
        %387 = sbr.rel (%p385) target = $region56
      $region55: #{tpu_custom_call.1} parent=5 // pred_region
        // Predicated region
        $region57: #{tpu_custom_call.1} parent=55 // pred_check
          %p388 = pneg %p59
        $region58: #{tpu_custom_call.1} parent=55 // pred_check_branch
          %390 = sbr.rel (%p388) target = $region60
        $region59: #{tpu_custom_call.1} parent=55 // pred_region
          %p391 = scmp.lt.s32.totalorder %s32, 1
          %s392 = scalar_select %p391, %s32, 1
          %p393 = scmp.lt.s32.totalorder %s33, 0
          %s394 = scalar_select %p393, %s33, 0
          %s395 = sadd.s32 %s394, %s392
          %s396 = smul.addr %s395, 8
          %s397 = scalar_lea.vmem %s0, %s396
        $region60: #{tpu_custom_call.1} parent=55 // pred_fallthru
          _
        // Predicated region
        $region61: #{tpu_custom_call.1} parent=55 // pred_check
          %p398 = pneg %p85
        $region62: #{tpu_custom_call.1} parent=55 // pred_check_branch
          %400 = sbr.rel (%p398) target = $region64
        $region63: #{tpu_custom_call.1} parent=55 // pred_region
          %s401 = sand.u32 %s75, 1
          %s402 = scalar_lea.sflag [#allocation5], %s401
          %s403 = sand.u32 %s75, 1
          %s404 = smul.addr %s403, 4
          %s405 = scalar_lea.vmem [#allocation4], %s404
          %s407 = ssub.s32 64, 64
          %408 = vsyncadd %s402, %s407
          %s409 = smul.addr %s32, 64
          %s410 = scalar_lea.hbm %s1, %s409
          %s412 = sshll.u32 %s405, 4
          %s413 = int_to_ptr.vmem [resolvable:$true] %s412
          %415 = dma.hbm_to_vmem [thread:$0]  %s410, 64, %s413, %s402
        $region64: #{tpu_custom_call.1} parent=55 // pred_fallthru
          _
      $region56: #{tpu_custom_call.1} parent=5 // pred_fallthru
        _
      %p416 = scmp.le.s32.totalorder 1, %s25
      %p417 = scmp.lt.s32.totalorder %s25, 3
      %p418 = pnand %p416, %p417
      %p419 = pneg %p418
      // Predicated region
      $region65: #{tpu_custom_call.1} parent=5 // pred_check
        _
      $region66: #{tpu_custom_call.1} parent=5 // pred_check_branch
        %421 = sbr.rel (%p418) target = $region68
      $region67: #{tpu_custom_call.1} parent=5 // pred_region
        %s422 = ssub.s32 %s25, 1
        %s423 = sand.u32 %s78, 1
        %s424 = scalar_lea.sflag [#allocation5], %s423
        %s425 = sand.u32 %s78, 1
        %s426 = smul.addr %s425, 4
        %s427 = scalar_lea.vmem [#allocation4], %s426
        // Predicated region
        $region69: #{tpu_custom_call.1} parent=67 // pred_check
          %p428 = pneg %p91
        $region70: #{tpu_custom_call.1} parent=67 // pred_check_branch
          %430 = sbr.rel (%p428) target = $region72
        $region71: #{tpu_custom_call.1} parent=67 // pred_region
          %431 = dma.done %s424, 64
        $region72: #{tpu_custom_call.1} parent=67 // pred_fallthru
          _
        // Predicated region
        $region73: #{tpu_custom_call.1} parent=67 // pred_check
          %p432 = pneg %p196
        $region74: #{tpu_custom_call.1} parent=67 // pred_check_branch
          %434 = sbr.rel (%p432) target = $region76
        $region75: #{tpu_custom_call.1} parent=67 // pred_region
          %435 = dma.done [#allocation8], 256
        $region76: #{tpu_custom_call.1} parent=67 // pred_fallthru
          _
        %p436 = scmp.lt.s32.totalorder %s34, 1
        %s437 = scalar_select %p436, %s34, 1
        %p438 = scmp.lt.s32.totalorder %s35, 0
        %s439 = scalar_select %p438, %s35, 0
        %s440 = sadd.s32 %s439, %s437
        %s441 = smul.addr %s440, 8
        %s442 = scalar_lea.vmem %s0, %s441
        %p443 = pneg %p65
        %p444 = pneg %p62
        %s445 = sand.u32 %s78, 1
        %s446 = scalar_lea.sflag [#allocation5], %s445
        %s447 = sand.u32 %s78, 1
        %s448 = smul.addr %s447, 4
        %s449 = scalar_lea.vmem [#allocation4], %s448
        %p450 = pneg %p91
        %p451 = pneg %p88
        %p452 = pneg %p112
        %p453 = pneg %p109
        %p454 = pneg %p133
        %p455 = pneg %p130
        %p456 = pneg %p154
        %p457 = pneg %p151
        %p458 = pneg %p175
        %p459 = pneg %p172
        %p460 = pneg %p196
        %p461 = pneg %p193
        %p462 = pneg %p217
        %p463 = pneg %p214
        %p464 = pneg %p238
        %p465 = pneg %p235
        %p466 = pneg %p259
        %p467 = pneg %p256
        %p468 = pneg %p280
        %p469 = pneg %p277
        %p470 = pneg %p301
        %p471 = pneg %p298
        %p472 = pneg %p329
        %p473 = pneg %p326
        %s474 = sand.u32 %s316, 1
        %s475 = scalar_lea.sflag [#allocation6], %s474
        %s476 = sand.u32 %s316, 1
        %s477 = smul.addr %s476, 8
        %s478 = scalar_lea.vmem [#allocation9], %s477
        %p479 = scmp.lt.s32.totalorder %s34, 1
        %s480 = scalar_select %p479, %s34, 1
        %p481 = scmp.lt.s32.totalorder %s35, 0
        %s482 = scalar_select %p481, %s35, 0
        %s483 = sadd.s32 %s482, %s480
        %s484 = smul.addr %s483, 8
        %s485 = scalar_lea.vmem %s0, %s484
        %p487 = scmp.eq.s32.totalorder %s35, 0
        // Predicated region
        $region77: #{tpu_custom_call.1} parent=67 // pred_check
          %p488 = pneg %p487
        $region78: #{tpu_custom_call.1} parent=67 // pred_check_branch
          %490 = sbr.rel (%p488) target = $region80
        $region79: #{tpu_custom_call.1} parent=67 // pred_region
          %v491 = vld [vmem:[%s427] sm:$0xf]
          %v492 = vld [vmem:[%s3] sm:$0xf]
          %v493 = vld [vmem:[%s3 + $0x4] sm:$0xf]
          %v494 = vld [vmem:[%s3 + $0x8] sm:$0xf]
          %v495 = vld [vmem:[%s3 + $0xc] sm:$0xf]
          %s496 = scalar_lea.vmem %s8, 1
          %v497 = vld [vmem:[%s496] sm:$0x1]
          %v499 = vlaneseq
          %v500 = vshrl.u32 %v499, 7
          %v501 = vsub.s32 0, %v500
          %v502 = vrot.slane %v497, %v501
          %v508 = vunpack.c.l.b16 %v492
          %v509 = vunpack.c.l.b16 %v493
          %v510 = vunpack.c.l.b16 %v494
          %v511 = vunpack.c.l.b16 %v495
          %v512 = vpack.c.b16 %v509, %v508
          %v513 = vpack.c.b16 %v511, %v510
          %vm516 = vcmask 261120
          %v518 = vsel %vm516, %v491, 0
          %520 = vmatprep.subr.bf16.mxu0 0
          %521 = vmatpush1.bf16.msra.mxu0 0
          %522 = vmatprep.subr.bf16.mxu0 0
          %523 = vmatpush1.bf16.msra.mxu0 0
          %524 = vmatprep.subr.bf16.mxu0 0
          %525 = vmatpush1.bf16.msra.mxu0 0
          %526 = vmatprep.subr.bf16.mxu0 0
          %527 = vmatpush1.bf16.msra.mxu0 0
          %528 = vmatprep.subr.bf16.mxu0 0
          %529 = vmatpush1.bf16.msra.mxu0 0
          %530 = vmatprep.subr.bf16.mxu0 0
          %531 = vmatpush1.bf16.msra.mxu0 0
          %532 = vmatprep.subr.bf16.mxu0 0
          %533 = vmatpush1.bf16.msra.mxu0 %v513
          %534 = vmatprep.subr.bf16.mxu0 0
          %535 = vmatpush1.bf16.msra.mxu0 %v512
          %536 = vmatprep.subr.bf16.mxu0 0
          %537 = vmatpush2.bf16.msra.mxu0 0
          %538 = vmatprep.subr.bf16.mxu0 0
          %539 = vmatpush2.bf16.msra.mxu0 0
          %540 = vmatprep.subr.bf16.mxu0 0
          %541 = vmatpush2.bf16.msra.mxu0 0
          %542 = vmatprep.subr.bf16.mxu0 0
          %543 = vmatpush2.bf16.msra.mxu0 0
          %544 = vmatprep.subr.bf16.mxu0 0
          %545 = vmatpush2.bf16.msra.mxu0 0
          %546 = vmatprep.subr.bf16.mxu0 0
          %547 = vmatpush2.bf16.msra.mxu0 0
          %548 = vmatprep.subr.bf16.mxu0 0
          %549 = vmatpush2.bf16.msra.mxu0 0
          %550 = vmatprep.subr.bf16.mxu0 0
          %551 = vmatpush2.bf16.msra.mxu0 0
          %552 = vmatprep.mubr.bf16.mxu0 0
          %553 = vmatmul.mubr.bf16.gmra.mxu0 %v518
          %v554 = vpop.f32.mrf.mxu0
          %v555 = vadd.f32 %v502, %v554
          %v556 = vpop.f32.mrf.mxu0
          %v557 = vpop.f32.mrf.mxu0
          %v558 = vpop.f32.mrf.mxu0
          %559 = vdwg.mxu0
          %v560 = vld [vmem:[%s4] sm:$0xf]
          %v561 = vld [vmem:[%s4 + $0x4] sm:$0xf]
          %v562 = vld [vmem:[%s4 + $0x8] sm:$0xf]
          %v563 = vld [vmem:[%s4 + $0xc] sm:$0xf]
          %s564 = scalar_lea.vmem %s8, 2
          %v565 = vld [vmem:[%s564] sm:$0x1]
          %v567 = vlaneseq
          %v568 = vshrl.u32 %v567, 7
          %v569 = vsub.s32 0, %v568
          %v570 = vrot.slane %v565, %v569
          %v576 = vunpack.c.l.b16 %v560
          %v577 = vunpack.c.l.b16 %v561
          %v578 = vunpack.c.l.b16 %v562
          %v579 = vunpack.c.l.b16 %v563
          %v580 = vpack.c.b16 %v577, %v576
          %v581 = vpack.c.b16 %v579, %v578
          %584 = vmatprep.subr.bf16.mxu0 0
          %585 = vmatpush1.bf16.msra.mxu0 0
          %586 = vmatprep.subr.bf16.mxu0 0
          %587 = vmatpush1.bf16.msra.mxu0 0
          %588 = vmatprep.subr.bf16.mxu0 0
          %589 = vmatpush1.bf16.msra.mxu0 0
          %590 = vmatprep.subr.bf16.mxu0 0
          %591 = vmatpush1.bf16.msra.mxu0 0
          %592 = vmatprep.subr.bf16.mxu0 0
          %593 = vmatpush1.bf16.msra.mxu0 0
          %594 = vmatprep.subr.bf16.mxu0 0
          %595 = vmatpush1.bf16.msra.mxu0 0
          %596 = vmatprep.subr.bf16.mxu0 0
          %597 = vmatpush1.bf16.msra.mxu0 %v581
          %598 = vmatprep.subr.bf16.mxu0 0
          %599 = vmatpush1.bf16.msra.mxu0 %v580
          %600 = vmatprep.subr.bf16.mxu0 0
          %601 = vmatpush2.bf16.msra.mxu0 0
          %602 = vmatprep.subr.bf16.mxu0 0
          %603 = vmatpush2.bf16.msra.mxu0 0
          %604 = vmatprep.subr.bf16.mxu0 0
          %605 = vmatpush2.bf16.msra.mxu0 0
          %606 = vmatprep.subr.bf16.mxu0 0
          %607 = vmatpush2.bf16.msra.mxu0 0
          %608 = vmatprep.subr.bf16.mxu0 0
          %609 = vmatpush2.bf16.msra.mxu0 0
          %610 = vmatprep.subr.bf16.mxu0 0
          %611 = vmatpush2.bf16.msra.mxu0 0
          %612 = vmatprep.subr.bf16.mxu0 0
          %613 = vmatpush2.bf16.msra.mxu0 0
          %614 = vmatprep.subr.bf16.mxu0 0
          %615 = vmatpush2.bf16.msra.mxu0 0
          %616 = vmatprep.mubr.bf16.mxu0 0
          %617 = vmatmul.mubr.bf16.gmra.mxu0 %v518
          %v618 = vpop.f32.mrf.mxu0
          %v619 = vadd.f32 %v570, %v618
          %v620 = vpop.f32.mrf.mxu0
          %v621 = vpop.f32.mrf.mxu0
          %v622 = vpop.f32.mrf.mxu0
          %623 = vdwg.mxu0
          %s624 = scalar_lea.vmem %s9, 2
          %v625 = vld [vmem:[%s624] sm:$0x1]
          %s626 = scalar_lea.vmem %s9, 3
          %v627 = vld [vmem:[%s626] sm:$0x1]
          %vm628 = vcmask 64512
          %v629 = vsel %vm628, %v555, 0.0
          %630 = vadd.xlane.f32.xlu0 %v629
          %v631 = vpop.xlane.xlu0 %630
          %v632 = vrcp.pop 8.0
          %v633 = vmul.f32 %v631, %v632
          %v634 = vsub.f32 %v555, %v633
          %v635 = vmul.f32 %v634, %v634
          %v636 = vsel %vm628, %v635, 0.0
          %637 = vadd.xlane.f32.xlu0 %v636
          %v638 = vpop.xlane.xlu0 %637
          %v639 = vmul.f32 %v638, %v632
          %v640 = vadd.f32 %v639, 1e-05
          %v641 = vrsqrt.pop %v640
          %v642 = vmul.f32 %v634, %v641
          %v644 = vlaneseq
          %v645 = vshrl.u32 %v644, 7
          %v646 = vsub.s32 0, %v645
          %v647 = vrot.slane %v625, %v646
          %v649 = vmul.f32 %v642, %v647
          %v651 = vlaneseq
          %v652 = vshrl.u32 %v651, 7
          %v653 = vsub.s32 0, %v652
          %v654 = vrot.slane %v627, %v653
          %v656 = vadd.f32 %v649, %v654
          %658 = vrot.lane.b32.xlu0 %v555, 120
          %v659 = vpop.permute.xlu0 %658
          %v661 = vsel %vm628, %v659, 0.0
          %662 = vadd.xlane.f32.xlu0 %v661
          %v663 = vpop.xlane.xlu0 %662
          %v664 = vmul.f32 %v663, %v632
          %v665 = vsub.f32 %v555, %v664
          %v666 = vmul.f32 %v665, %v665
          %668 = vrot.lane.b32.xlu0 %v666, 120
          %v669 = vpop.permute.xlu0 %668
          %v671 = vsel %vm628, %v669, 0.0
          %672 = vadd.xlane.f32.xlu0 %v671
          %v673 = vpop.xlane.xlu0 %672
          %v674 = vmul.f32 %v673, %v632
          %v675 = vadd.f32 %v674, 1e-05
          %v676 = vrsqrt.pop %v675
          %v677 = vmul.f32 %v665, %v676
          %678 = vrot.lane.b32.xlu0 %v647, 8
          %v679 = vpop.permute.xlu0 %678
          %v681 = vmul.f32 %v677, %v679
          %682 = vrot.lane.b32.xlu0 %v654, 8
          %v683 = vpop.permute.xlu0 %682
          %v685 = vadd.f32 %v681, %v683
          %686 = vrot.lane.b32.xlu0 %v555, 112
          %v687 = vpop.permute.xlu0 %686
          %v689 = vsel %vm628, %v687, 0.0
          %690 = vadd.xlane.f32.xlu0 %v689
          %v691 = vpop.xlane.xlu0 %690
          %v692 = vmul.f32 %v691, %v632
          %v693 = vsub.f32 %v555, %v692
          %v694 = vmul.f32 %v693, %v693
          %696 = vrot.lane.b32.xlu0 %v694, 112
          %v697 = vpop.permute.xlu0 %696
          %v699 = vsel %vm628, %v697, 0.0
          %700 = vadd.xlane.f32.xlu0 %v699
          %v701 = vpop.xlane.xlu0 %700
          %v702 = vmul.f32 %v701, %v632
          %v703 = vadd.f32 %v702, 1e-05
          %v704 = vrsqrt.pop %v703
          %v705 = vmul.f32 %v693, %v704
          %706 = vrot.lane.b32.xlu0 %v647, 16
          %v707 = vpop.permute.xlu0 %706
          %v709 = vmul.f32 %v705, %v707
          %710 = vrot.lane.b32.xlu0 %v654, 16
          %v711 = vpop.permute.xlu0 %710
          %v713 = vadd.f32 %v709, %v711
          %714 = vrot.lane.b32.xlu0 %v555, 104
          %v715 = vpop.permute.xlu0 %714
          %v717 = vsel %vm628, %v715, 0.0
          %718 = vadd.xlane.f32.xlu0 %v717
          %v719 = vpop.xlane.xlu0 %718
          %v720 = vmul.f32 %v719, %v632
          %v721 = vsub.f32 %v555, %v720
          %v722 = vmul.f32 %v721, %v721
          %724 = vrot.lane.b32.xlu0 %v722, 104
          %v725 = vpop.permute.xlu0 %724
          %v727 = vsel %vm628, %v725, 0.0
          %728 = vadd.xlane.f32.xlu0 %v727
          %v729 = vpop.xlane.xlu0 %728
          %v730 = vmul.f32 %v729, %v632
          %v731 = vadd.f32 %v730, 1e-05
          %v732 = vrsqrt.pop %v731
          %v733 = vmul.f32 %v721, %v732
          %734 = vrot.lane.b32.xlu0 %v647, 24
          %v735 = vpop.permute.xlu0 %734
          %v737 = vmul.f32 %v733, %v735
          %738 = vrot.lane.b32.xlu0 %v654, 24
          %v739 = vpop.permute.xlu0 %738
          %v741 = vadd.f32 %v737, %v739
          %v742 = vsel %vm628, %v656, %v685
          %vm743 = vcmask 130048
          %v744 = vsel %vm743, %v742, %v713
          %vm745 = vcmask 195584
          %v746 = vsel %vm745, %v744, %v741
          %v747 = vpack.c.bf16 %v746, %v746
          %vm748 = vcmask 257024
          %749 = vst.msk [vmem:[#allocation2] sm:$0xf] %vm748, %v747
          %v750 = vpack.c.bf16 %v619, %v619
          %751 = vst.msk [vmem:[#allocation3] sm:$0xf] %vm748, %v750
        $region80: #{tpu_custom_call.1} parent=67 // pred_fallthru
          _
        %v752 = vld [vmem:[%s485] sm:$0xff]
        %v753 = vpack.c.bf16 %v752, %v752
        %v754 = vld [vmem:[%s2] sm:$0xf]
        %v755 = vld [vmem:[%s2 + $0x4] sm:$0xf]
        %v756 = vld [vmem:[%s2 + $0x8] sm:$0xf]
        %v757 = vld [vmem:[%s2 + $0xc] sm:$0xf]
        %v758 = vld [vmem:[%s8] sm:$0x1]
        %v760 = vlaneseq
        %v761 = vshrl.u32 %v760, 7
        %v762 = vsub.s32 0, %v761
        %v763 = vrot.slane %v758, %v762
        %v769 = vunpack.c.l.b16 %v754
        %v770 = vunpack.c.l.b16 %v755
        %v771 = vunpack.c.l.b16 %v756
        %v772 = vunpack.c.l.b16 %v757
        %v773 = vpack.c.b16 %v770, %v769
        %v774 = vpack.c.b16 %v772, %v771
        %vm777 = vcmask 261120
        %v779 = vsel %vm777, %v753, 0
        %781 = vmatprep.subr.bf16.mxu0 0
        %782 = vmatpush1.bf16.msra.mxu0 0
        %783 = vmatprep.subr.bf16.mxu0 0
        %784 = vmatpush1.bf16.msra.mxu0 0
        %785 = vmatprep.subr.bf16.mxu0 0
        %786 = vmatpush1.bf16.msra.mxu0 0
        %787 = vmatprep.subr.bf16.mxu0 0
        %788 = vmatpush1.bf16.msra.mxu0 0
        %789 = vmatprep.subr.bf16.mxu0 0
        %790 = vmatpush1.bf16.msra.mxu0 0
        %791 = vmatprep.subr.bf16.mxu0 0
        %792 = vmatpush1.bf16.msra.mxu0 0
        %793 = vmatprep.subr.bf16.mxu0 0
        %794 = vmatpush1.bf16.msra.mxu0 %v774
        %795 = vmatprep.subr.bf16.mxu0 0
        %796 = vmatpush1.bf16.msra.mxu0 %v773
        %797 = vmatprep.subr.bf16.mxu0 0
        %798 = vmatpush2.bf16.msra.mxu0 0
        %799 = vmatprep.subr.bf16.mxu0 0
        %800 = vmatpush2.bf16.msra.mxu0 0
        %801 = vmatprep.subr.bf16.mxu0 0
        %802 = vmatpush2.bf16.msra.mxu0 0
        %803 = vmatprep.subr.bf16.mxu0 0
        %804 = vmatpush2.bf16.msra.mxu0 0
        %805 = vmatprep.subr.bf16.mxu0 0
        %806 = vmatpush2.bf16.msra.mxu0 0
        %807 = vmatprep.subr.bf16.mxu0 0
        %808 = vmatpush2.bf16.msra.mxu0 0
        %809 = vmatprep.subr.bf16.mxu0 0
        %810 = vmatpush2.bf16.msra.mxu0 0
        %811 = vmatprep.subr.bf16.mxu0 0
        %812 = vmatpush2.bf16.msra.mxu0 0
        %813 = vmatprep.mubr.bf16.mxu0 0
        %814 = vmatmul.mubr.bf16.gmra.mxu0 %v779
        %v815 = vpop.f32.mrf.mxu0
        %v816 = vadd.f32 %v763, %v815
        %v817 = vpop.f32.mrf.mxu0
        %v818 = vpop.f32.mrf.mxu0
        %v819 = vpop.f32.mrf.mxu0
        %820 = vdwg.mxu0
        %v821 = vld [vmem:[%s9] sm:$0x1]
        %s822 = scalar_lea.vmem %s9, 1
        %v823 = vld [vmem:[%s822] sm:$0x1]
        %vm824 = vcmask 64512
        %v825 = vsel %vm824, %v816, 0.0
        %826 = vadd.xlane.f32.xlu0 %v825
        %v827 = vpop.xlane.xlu0 %826
        %v828 = vrcp.pop 8.0
        %v829 = vmul.f32 %v827, %v828
        %v830 = vsub.f32 %v816, %v829
        %v831 = vmul.f32 %v830, %v830
        %v832 = vsel %vm824, %v831, 0.0
        %833 = vadd.xlane.f32.xlu0 %v832
        %v834 = vpop.xlane.xlu0 %833
        %v835 = vmul.f32 %v834, %v828
        %v836 = vadd.f32 %v835, 1e-05
        %v837 = vrsqrt.pop %v836
        %v838 = vmul.f32 %v830, %v837
        %v840 = vlaneseq
        %v841 = vshrl.u32 %v840, 7
        %v842 = vsub.s32 0, %v841
        %v843 = vrot.slane %v821, %v842
        %v845 = vmul.f32 %v838, %v843
        %v847 = vlaneseq
        %v848 = vshrl.u32 %v847, 7
        %v849 = vsub.s32 0, %v848
        %v850 = vrot.slane %v823, %v849
        %v852 = vadd.f32 %v845, %v850
        %v853 = vpack.c.bf16 %v852, %v852
        %v854 = vld [vmem:[#allocation2] sm:$0xf]
        %v856 = vsel %vm824, %v853, 0
        %v859 = vsel %vm824, %v854, 0
        %861 = vmatprep.subr.bf16.mxu0 0
        %862 = vmatpush1.bf16.xpose.msra.mxu0 0
        %863 = vmatprep.subr.bf16.mxu0 0
        %864 = vmatpush1.bf16.xpose.msra.mxu0 0
        %865 = vmatprep.subr.bf16.mxu0 0
        %866 = vmatpush1.bf16.xpose.msra.mxu0 0
        %867 = vmatprep.subr.bf16.mxu0 0
        %868 = vmatpush1.bf16.xpose.msra.mxu0 0
        %869 = vmatprep.subr.bf16.mxu0 0
        %870 = vmatpush1.bf16.xpose.msra.mxu0 0
        %871 = vmatprep.subr.bf16.mxu0 0
        %872 = vmatpush1.bf16.xpose.msra.mxu0 0
        %873 = vmatprep.subr.bf16.mxu0 0
        %874 = vmatpush1.bf16.xpose.msra.mxu0 0
        %875 = vmatprep.subr.bf16.mxu0 0
        %876 = vmatpush1.bf16.xpose.msra.mxu0 %v859
        %877 = vmatprep.subr.bf16.mxu0 0
        %878 = vmatpush2.bf16.xpose.msra.mxu0 0
        %879 = vmatprep.subr.bf16.mxu0 0
        %880 = vmatpush2.bf16.xpose.msra.mxu0 0
        %881 = vmatprep.subr.bf16.mxu0 0
        %882 = vmatpush2.bf16.xpose.msra.mxu0 0
        %883 = vmatprep.subr.bf16.mxu0 0
        %884 = vmatpush2.bf16.xpose.msra.mxu0 0
        %885 = vmatprep.subr.bf16.mxu0 0
        %886 = vmatpush2.bf16.xpose.msra.mxu0 0
        %887 = vmatprep.subr.bf16.mxu0 0
        %888 = vmatpush2.bf16.xpose.msra.mxu0 0
        %889 = vmatprep.subr.bf16.mxu0 0
        %890 = vmatpush2.bf16.xpose.msra.mxu0 0
        %891 = vmatprep.subr.bf16.mxu0 0
        %892 = vmatpush2.bf16.xpose.msra.mxu0 0
        %893 = vmatprep.mubr.bf16.mxu0 0
        %894 = vmatmul.mubr.bf16.gmra.mxu0 %v856
        %v895 = vpop.f32.mrf.mxu0
        %v896 = vadd.f32 0.0, %v895
        %v897 = vpop.f32.mrf.mxu0
        %v898 = vpop.f32.mrf.mxu0
        %v899 = vpop.f32.mrf.mxu0
        %900 = vdwg.mxu0
        %v901 = vsel %vm824, %v896, -inf
        %902 = vmax.xlane.f32.xlu0 %v901
        %v903 = vpop.xlane.xlu0 %902
        %v904 = vsub.f32 %v896, %v903
        %v905 = vmul.f32 %v904, 1.442695
        %v906 = vpow.pop %v905
        %v907 = vsel %vm824, %v906, 0.0
        %908 = vadd.xlane.f32.xlu0 %v907
        %v909 = vpop.xlane.xlu0 %908
        %v910 = vrcp.pop %v909
        %v911 = vmul.f32 %v906, %v910
        %v912 = vpack.c.bf16 %v911, %v911
        %v913 = vld [vmem:[#allocation3] sm:$0xf]
        %v915 = vsel %vm824, %v912, 0
        %vm917 = vcmask 1043456
        %v919 = vsel %vm917, %v913, 0
        %921 = vmatprep.subr.bf16.mxu0 0
        %922 = vmatpush1.bf16.msra.mxu0 0
        %923 = vmatprep.subr.bf16.mxu0 0
        %924 = vmatpush1.bf16.msra.mxu0 0
        %925 = vmatprep.subr.bf16.mxu0 0
        %926 = vmatpush1.bf16.msra.mxu0 0
        %927 = vmatprep.subr.bf16.mxu0 0
        %928 = vmatpush1.bf16.msra.mxu0 0
        %929 = vmatprep.subr.bf16.mxu0 0
        %930 = vmatpush1.bf16.msra.mxu0 0
        %931 = vmatprep.subr.bf16.mxu0 0
        %932 = vmatpush1.bf16.msra.mxu0 0
        %933 = vmatprep.subr.bf16.mxu0 0
        %934 = vmatpush1.bf16.msra.mxu0 0
        %935 = vmatprep.subr.bf16.mxu0 0
        %936 = vmatpush1.bf16.msra.mxu0 %v919
        %937 = vmatprep.subr.bf16.mxu0 0
        %938 = vmatpush2.bf16.msra.mxu0 0
        %939 = vmatprep.subr.bf16.mxu0 0
        %940 = vmatpush2.bf16.msra.mxu0 0
        %941 = vmatprep.subr.bf16.mxu0 0
        %942 = vmatpush2.bf16.msra.mxu0 0
        %943 = vmatprep.subr.bf16.mxu0 0
        %944 = vmatpush2.bf16.msra.mxu0 0
        %945 = vmatprep.subr.bf16.mxu0 0
        %946 = vmatpush2.bf16.msra.mxu0 0
        %947 = vmatprep.subr.bf16.mxu0 0
        %948 = vmatpush2.bf16.msra.mxu0 0
        %949 = vmatprep.subr.bf16.mxu0 0
        %950 = vmatpush2.bf16.msra.mxu0 0
        %951 = vmatprep.subr.bf16.mxu0 0
        %952 = vmatpush2.bf16.msra.mxu0 0
        %953 = vmatprep.mubr.bf16.mxu0 0
        %954 = vmatmul.mubr.bf16.gmra.mxu0 %v915
        %v955 = vpop.f32.mrf.mxu0
        %v956 = vadd.f32 0.0, %v955
        %v957 = vpop.f32.mrf.mxu0
        %v958 = vpop.f32.mrf.mxu0
        %v959 = vpop.f32.mrf.mxu0
        %960 = vdwg.mxu0
        %962 = vrot.lane.b32.xlu0 %v816, 120
        %v963 = vpop.permute.xlu0 %962
        %v965 = vsel %vm824, %v963, 0.0
        %966 = vadd.xlane.f32.xlu0 %v965
        %v967 = vpop.xlane.xlu0 %966
        %v968 = vmul.f32 %v967, %v828
        %v969 = vsub.f32 %v816, %v968
        %v970 = vmul.f32 %v969, %v969
        %972 = vrot.lane.b32.xlu0 %v970, 120
        %v973 = vpop.permute.xlu0 %972
        %v975 = vsel %vm824, %v973, 0.0
        %976 = vadd.xlane.f32.xlu0 %v975
        %v977 = vpop.xlane.xlu0 %976
        %v978 = vmul.f32 %v977, %v828
        %v979 = vadd.f32 %v978, 1e-05
        %v980 = vrsqrt.pop %v979
        %v981 = vmul.f32 %v969, %v980
        %982 = vrot.lane.b32.xlu0 %v843, 8
        %v983 = vpop.permute.xlu0 %982
        %v985 = vmul.f32 %v981, %v983
        %986 = vrot.lane.b32.xlu0 %v850, 8
        %v987 = vpop.permute.xlu0 %986
        %v989 = vadd.f32 %v985, %v987
        %v990 = vpack.c.bf16 %v989, %v989
        %992 = vrot.lane.b32.xlu0 %v990, 120
        %v993 = vpop.permute.xlu0 %992
        %v995 = vunpack.c.l.b16 %v854
        %v996 = vpack.c.b16 %v995, %v995
        %997 = vrot.lane.b32.xlu0 %v996, 120
        %v998 = vpop.permute.xlu0 %997
        %v1000 = vsel %vm824, %v993, 0
        %v1003 = vsel %vm824, %v998, 0
        %1005 = vmatprep.subr.bf16.mxu0 0
        %1006 = vmatpush1.bf16.xpose.msra.mxu0 0
        %1007 = vmatprep.subr.bf16.mxu0 0
        %1008 = vmatpush1.bf16.xpose.msra.mxu0 0
        %1009 = vmatprep.subr.bf16.mxu0 0
        %1010 = vmatpush1.bf16.xpose.msra.mxu0 0
        %1011 = vmatprep.subr.bf16.mxu0 0
        %1012 = vmatpush1.bf16.xpose.msra.mxu0 0
        %1013 = vmatprep.subr.bf16.mxu0 0
        %1014 = vmatpush1.bf16.xpose.msra.mxu0 0
        %1015 = vmatprep.subr.bf16.mxu0 0
        %1016 = vmatpush1.bf16.xpose.msra.mxu0 0
        %1017 = vmatprep.subr.bf16.mxu0 0
        %1018 = vmatpush1.bf16.xpose.msra.mxu0 0
        %1019 = vmatprep.subr.bf16.mxu0 0
        %1020 = vmatpush1.bf16.xpose.msra.mxu0 %v1003
        %1021 = vmatprep.subr.bf16.mxu0 0
        %1022 = vmatpush2.bf16.xpose.msra.mxu0 0
        %1023 = vmatprep.subr.bf16.mxu0 0
        %1024 = vmatpush2.bf16.xpose.msra.mxu0 0
        %1025 = vmatprep.subr.bf16.mxu0 0
        %1026 = vmatpush2.bf16.xpose.msra.mxu0 0
        %1027 = vmatprep.subr.bf16.mxu0 0
        %1028 = vmatpush2.bf16.xpose.msra.mxu0 0
        %1029 = vmatprep.subr.bf16.mxu0 0
        %1030 = vmatpush2.bf16.xpose.msra.mxu0 0
        %1031 = vmatprep.subr.bf16.mxu0 0
        %1032 = vmatpush2.bf16.xpose.msra.mxu0 0
        %1033 = vmatprep.subr.bf16.mxu0 0
        %1034 = vmatpush2.bf16.xpose.msra.mxu0 0
        %1035 = vmatprep.subr.bf16.mxu0 0
        %1036 = vmatpush2.bf16.xpose.msra.mxu0 0
        %1037 = vmatprep.mubr.bf16.mxu0 0
        %1038 = vmatmul.mubr.bf16.gmra.mxu0 %v1000
        %v1039 = vpop.f32.mrf.mxu0
        %v1040 = vadd.f32 0.0, %v1039
        %v1041 = vpop.f32.mrf.mxu0
        %v1042 = vpop.f32.mrf.mxu0
        %v1043 = vpop.f32.mrf.mxu0
        %1044 = vdwg.mxu0
        %v1045 = vsel %vm824, %v1040, -inf
        %1046 = vmax.xlane.f32.xlu0 %v1045
        %v1047 = vpop.xlane.xlu0 %1046
        %v1048 = vsub.f32 %v1040, %v1047
        %v1049 = vmul.f32 %v1048, 1.442695
        %v1050 = vpow.pop %v1049
        %v1051 = vsel %vm824, %v1050, 0.0
        %1052 = vadd.xlane.f32.xlu0 %v1051
        %v1053 = vpop.xlane.xlu0 %1052
        %v1054 = vrcp.pop %v1053
        %v1055 = vmul.f32 %v1050, %v1054
        %v1056 = vpack.c.bf16 %v1055, %v1055
        %v1058 = vunpack.c.l.b16 %v913
        %v1059 = vpack.c.b16 %v1058, %v1058
        %1060 = vrot.lane.b32.xlu0 %v1059, 120
        %v1061 = vpop.permute.xlu0 %1060
        %v1063 = vsel %vm824, %v1056, 0
        %v1066 = vsel %vm917, %v1061, 0
        %1068 = vmatprep.subr.bf16.mxu0 0
        %1069 = vmatpush1.bf16.msra.mxu0 0
        %1070 = vmatprep.subr.bf16.mxu0 0
        %1071 = vmatpush1.bf16.msra.mxu0 0
        %1072 = vmatprep.subr.bf16.mxu0 0
        %1073 = vmatpush1.bf16.msra.mxu0 0
        %1074 = vmatprep.subr.bf16.mxu0 0
        %1075 = vmatpush1.bf16.msra.mxu0 0
        %1076 = vmatprep.subr.bf16.mxu0 0
        %1077 = vmatpush1.bf16.msra.mxu0 0
        %1078 = vmatprep.subr.bf16.mxu0 0
        %1079 = vmatpush1.bf16.msra.mxu0 0
        %1080 = vmatprep.subr.bf16.mxu0 0
        %1081 = vmatpush1.bf16.msra.mxu0 0
        %1082 = vmatprep.subr.bf16.mxu0 0
        %1083 = vmatpush1.bf16.msra.mxu0 %v1066
        %1084 = vmatprep.subr.bf16.mxu0 0
        %1085 = vmatpush2.bf16.msra.mxu0 0
        %1086 = vmatprep.subr.bf16.mxu0 0
        %1087 = vmatpush2.bf16.msra.mxu0 0
        %1088 = vmatprep.subr.bf16.mxu0 0
        %1089 = vmatpush2.bf16.msra.mxu0 0
        %1090 = vmatprep.subr.bf16.mxu0 0
        %1091 = vmatpush2.bf16.msra.mxu0 0
        %1092 = vmatprep.subr.bf16.mxu0 0
        %1093 = vmatpush2.bf16.msra.mxu0 0
        %1094 = vmatprep.subr.bf16.mxu0 0
        %1095 = vmatpush2.bf16.msra.mxu0 0
        %1096 = vmatprep.subr.bf16.mxu0 0
        %1097 = vmatpush2.bf16.msra.mxu0 0
        %1098 = vmatprep.subr.bf16.mxu0 0
        %1099 = vmatpush2.bf16.msra.mxu0 0
        %1100 = vmatprep.mubr.bf16.mxu0 0
        %1101 = vmatmul.mubr.bf16.gmra.mxu0 %v1063
        %v1102 = vpop.f32.mrf.mxu0
        %v1103 = vadd.f32 0.0, %v1102
        %v1104 = vpop.f32.mrf.mxu0
        %v1105 = vpop.f32.mrf.mxu0
        %v1106 = vpop.f32.mrf.mxu0
        %1107 = vdwg.mxu0
        %1108 = vrot.lane.b32.xlu0 %v816, 112
        %v1109 = vpop.permute.xlu0 %1108
        %v1111 = vsel %vm824, %v1109, 0.0
        %1112 = vadd.xlane.f32.xlu0 %v1111
        %v1113 = vpop.xlane.xlu0 %1112
        %v1114 = vmul.f32 %v1113, %v828
        %v1115 = vsub.f32 %v816, %v1114
        %v1116 = vmul.f32 %v1115, %v1115
        %1118 = vrot.lane.b32.xlu0 %v1116, 112
        %v1119 = vpop.permute.xlu0 %1118
        %v1121 = vsel %vm824, %v1119, 0.0
        %1122 = vadd.xlane.f32.xlu0 %v1121
        %v1123 = vpop.xlane.xlu0 %1122
        %v1124 = vmul.f32 %v1123, %v828
        %v1125 = vadd.f32 %v1124, 1e-05
        %v1126 = vrsqrt.pop %v1125
        %v1127 = vmul.f32 %v1115, %v1126
        %1128 = vrot.lane.b32.xlu0 %v843, 16
        %v1129 = vpop.permute.xlu0 %1128
        %v1131 = vmul.f32 %v1127, %v1129
        %1132 = vrot.lane.b32.xlu0 %v850, 16
        %v1133 = vpop.permute.xlu0 %1132
        %v1135 = vadd.f32 %v1131, %v1133
        %v1136 = vpack.c.bf16 %v1135, %v1135
        %1138 = vrot.lane.b32.xlu0 %v1136, 112
        %v1139 = vpop.permute.xlu0 %1138
        %1140 = vrot.lane.b32.xlu0 %v996, 112
        %v1141 = vpop.permute.xlu0 %1140
        %v1143 = vsel %vm824, %v1139, 0
        %v1146 = vsel %vm824, %v1141, 0
        %1148 = vmatprep.subr.bf16.mxu0 0
        %1149 = vmatpush1.bf16.xpose.msra.mxu0 0
        %1150 = vmatprep.subr.bf16.mxu0 0
        %1151 = vmatpush1.bf16.xpose.msra.mxu0 0
        %1152 = vmatprep.subr.bf16.mxu0 0
        %1153 = vmatpush1.bf16.xpose.msra.mxu0 0
        %1154 = vmatprep.subr.bf16.mxu0 0
        %1155 = vmatpush1.bf16.xpose.msra.mxu0 0
        %1156 = vmatprep.subr.bf16.mxu0 0
        %1157 = vmatpush1.bf16.xpose.msra.mxu0 0
        %1158 = vmatprep.subr.bf16.mxu0 0
        %1159 = vmatpush1.bf16.xpose.msra.mxu0 0
        %1160 = vmatprep.subr.bf16.mxu0 0
        %1161 = vmatpush1.bf16.xpose.msra.mxu0 0
        %1162 = vmatprep.subr.bf16.mxu0 0
        %1163 = vmatpush1.bf16.xpose.msra.mxu0 %v1146
        %1164 = vmatprep.subr.bf16.mxu0 0
        %1165 = vmatpush2.bf16.xpose.msra.mxu0 0
        %1166 = vmatprep.subr.bf16.mxu0 0
        %1167 = vmatpush2.bf16.xpose.msra.mxu0 0
        %1168 = vmatprep.subr.bf16.mxu0 0
        %1169 = vmatpush2.bf16.xpose.msra.mxu0 0
        %1170 = vmatprep.subr.bf16.mxu0 0
        %1171 = vmatpush2.bf16.xpose.msra.mxu0 0
        %1172 = vmatprep.subr.bf16.mxu0 0
        %1173 = vmatpush2.bf16.xpose.msra.mxu0 0
        %1174 = vmatprep.subr.bf16.mxu0 0
        %1175 = vmatpush2.bf16.xpose.msra.mxu0 0
        %1176 = vmatprep.subr.bf16.mxu0 0
        %1177 = vmatpush2.bf16.xpose.msra.mxu0 0
        %1178 = vmatprep.subr.bf16.mxu0 0
        %1179 = vmatpush2.bf16.xpose.msra.mxu0 0
        %1180 = vmatprep.mubr.bf16.mxu0 0
        %1181 = vmatmul.mubr.bf16.gmra.mxu0 %v1143
        %v1182 = vpop.f32.mrf.mxu0
        %v1183 = vadd.f32 0.0, %v1182
        %v1184 = vpop.f32.mrf.mxu0
        %v1185 = vpop.f32.mrf.mxu0
        %v1186 = vpop.f32.mrf.mxu0
        %1187 = vdwg.mxu0
        %v1188 = vsel %vm824, %v1183, -inf
        %1189 = vmax.xlane.f32.xlu0 %v1188
        %v1190 = vpop.xlane.xlu0 %1189
        %v1191 = vsub.f32 %v1183, %v1190
        %v1192 = vmul.f32 %v1191, 1.442695
        %v1193 = vpow.pop %v1192
        %v1194 = vsel %vm824, %v1193, 0.0
        %1195 = vadd.xlane.f32.xlu0 %v1194
        %v1196 = vpop.xlane.xlu0 %1195
        %v1197 = vrcp.pop %v1196
        %v1198 = vmul.f32 %v1193, %v1197
        %v1199 = vpack.c.bf16 %v1198, %v1198
        %1200 = vrot.lane.b32.xlu0 %v1059, 112
        %v1201 = vpop.permute.xlu0 %1200
        %v1203 = vsel %vm824, %v1199, 0
        %v1206 = vsel %vm917, %v1201, 0
        %1208 = vmatprep.subr.bf16.mxu0 0
        %1209 = vmatpush1.bf16.msra.mxu0 0
        %1210 = vmatprep.subr.bf16.mxu0 0
        %1211 = vmatpush1.bf16.msra.mxu0 0
        %1212 = vmatprep.subr.bf16.mxu0 0
        %1213 = vmatpush1.bf16.msra.mxu0 0
        %1214 = vmatprep.subr.bf16.mxu0 0
        %1215 = vmatpush1.bf16.msra.mxu0 0
        %1216 = vmatprep.subr.bf16.mxu0 0
        %1217 = vmatpush1.bf16.msra.mxu0 0
        %1218 = vmatprep.subr.bf16.mxu0 0
        %1219 = vmatpush1.bf16.msra.mxu0 0
        %1220 = vmatprep.subr.bf16.mxu0 0
        %1221 = vmatpush1.bf16.msra.mxu0 0
        %1222 = vmatprep.subr.bf16.mxu0 0
        %1223 = vmatpush1.bf16.msra.mxu0 %v1206
        %1224 = vmatprep.subr.bf16.mxu0 0
        %1225 = vmatpush2.bf16.msra.mxu0 0
        %1226 = vmatprep.subr.bf16.mxu0 0
        %1227 = vmatpush2.bf16.msra.mxu0 0
        %1228 = vmatprep.subr.bf16.mxu0 0
        %1229 = vmatpush2.bf16.msra.mxu0 0
        %1230 = vmatprep.subr.bf16.mxu0 0
        %1231 = vmatpush2.bf16.msra.mxu0 0
        %1232 = vmatprep.subr.bf16.mxu0 0
        %1233 = vmatpush2.bf16.msra.mxu0 0
        %1234 = vmatprep.subr.bf16.mxu0 0
        %1235 = vmatpush2.bf16.msra.mxu0 0
        %1236 = vmatprep.subr.bf16.mxu0 0
        %1237 = vmatpush2.bf16.msra.mxu0 0
        %1238 = vmatprep.subr.bf16.mxu0 0
        %1239 = vmatpush2.bf16.msra.mxu0 0
        %1240 = vmatprep.mubr.bf16.mxu0 0
        %1241 = vmatmul.mubr.bf16.gmra.mxu0 %v1203
        %v1242 = vpop.f32.mrf.mxu0
        %v1243 = vadd.f32 0.0, %v1242
        %v1244 = vpop.f32.mrf.mxu0
        %v1245 = vpop.f32.mrf.mxu0
        %v1246 = vpop.f32.mrf.mxu0
        %1247 = vdwg.mxu0
        %1248 = vrot.lane.b32.xlu0 %v816, 104
        %v1249 = vpop.permute.xlu0 %1248
        %v1251 = vsel %vm824, %v1249, 0.0
        %1252 = vadd.xlane.f32.xlu0 %v1251
        %v1253 = vpop.xlane.xlu0 %1252
        %v1254 = vmul.f32 %v1253, %v828
        %v1255 = vsub.f32 %v816, %v1254
        %v1256 = vmul.f32 %v1255, %v1255
        %1258 = vrot.lane.b32.xlu0 %v1256, 104
        %v1259 = vpop.permute.xlu0 %1258
        %v1261 = vsel %vm824, %v1259, 0.0
        %1262 = vadd.xlane.f32.xlu0 %v1261
        %v1263 = vpop.xlane.xlu0 %1262
        %v1264 = vmul.f32 %v1263, %v828
        %v1265 = vadd.f32 %v1264, 1e-05
        %v1266 = vrsqrt.pop %v1265
        %v1267 = vmul.f32 %v1255, %v1266
        %1268 = vrot.lane.b32.xlu0 %v843, 24
        %v1269 = vpop.permute.xlu0 %1268
        %v1271 = vmul.f32 %v1267, %v1269
        %1272 = vrot.lane.b32.xlu0 %v850, 24
        %v1273 = vpop.permute.xlu0 %1272
        %v1275 = vadd.f32 %v1271, %v1273
        %v1276 = vpack.c.bf16 %v1275, %v1275
        %1278 = vrot.lane.b32.xlu0 %v1276, 104
        %v1279 = vpop.permute.xlu0 %1278
        %1280 = vrot.lane.b32.xlu0 %v996, 104
        %v1281 = vpop.permute.xlu0 %1280
        %v1283 = vsel %vm824, %v1279, 0
        %v1286 = vsel %vm824, %v1281, 0
        %1288 = vmatprep.subr.bf16.mxu0 0
        %1289 = vmatpush1.bf16.xpose.msra.mxu0 0
        %1290 = vmatprep.subr.bf16.mxu0 0
        %1291 = vmatpush1.bf16.xpose.msra.mxu0 0
        %1292 = vmatprep.subr.bf16.mxu0 0
        %1293 = vmatpush1.bf16.xpose.msra.mxu0 0
        %1294 = vmatprep.subr.bf16.mxu0 0
        %1295 = vmatpush1.bf16.xpose.msra.mxu0 0
        %1296 = vmatprep.subr.bf16.mxu0 0
        %1297 = vmatpush1.bf16.xpose.msra.mxu0 0
        %1298 = vmatprep.subr.bf16.mxu0 0
        %1299 = vmatpush1.bf16.xpose.msra.mxu0 0
        %1300 = vmatprep.subr.bf16.mxu0 0
        %1301 = vmatpush1.bf16.xpose.msra.mxu0 0
        %1302 = vmatprep.subr.bf16.mxu0 0
        %1303 = vmatpush1.bf16.xpose.msra.mxu0 %v1286
        %1304 = vmatprep.subr.bf16.mxu0 0
        %1305 = vmatpush2.bf16.xpose.msra.mxu0 0
        %1306 = vmatprep.subr.bf16.mxu0 0
        %1307 = vmatpush2.bf16.xpose.msra.mxu0 0
        %1308 = vmatprep.subr.bf16.mxu0 0
        %1309 = vmatpush2.bf16.xpose.msra.mxu0 0
        %1310 = vmatprep.subr.bf16.mxu0 0
        %1311 = vmatpush2.bf16.xpose.msra.mxu0 0
        %1312 = vmatprep.subr.bf16.mxu0 0
        %1313 = vmatpush2.bf16.xpose.msra.mxu0 0
        %1314 = vmatprep.subr.bf16.mxu0 0
        %1315 = vmatpush2.bf16.xpose.msra.mxu0 0
        %1316 = vmatprep.subr.bf16.mxu0 0
        %1317 = vmatpush2.bf16.xpose.msra.mxu0 0
        %1318 = vmatprep.subr.bf16.mxu0 0
        %1319 = vmatpush2.bf16.xpose.msra.mxu0 0
        %1320 = vmatprep.mubr.bf16.mxu0 0
        %1321 = vmatmul.mubr.bf16.gmra.mxu0 %v1283
        %v1322 = vpop.f32.mrf.mxu0
        %v1323 = vadd.f32 0.0, %v1322
        %v1324 = vpop.f32.mrf.mxu0
        %v1325 = vpop.f32.mrf.mxu0
        %v1326 = vpop.f32.mrf.mxu0
        %1327 = vdwg.mxu0
        %v1328 = vsel %vm824, %v1323, -inf
        %1329 = vmax.xlane.f32.xlu0 %v1328
        %v1330 = vpop.xlane.xlu0 %1329
        %v1331 = vsub.f32 %v1323, %v1330
        %v1332 = vmul.f32 %v1331, 1.442695
        %v1333 = vpow.pop %v1332
        %v1334 = vsel %vm824, %v1333, 0.0
        %1335 = vadd.xlane.f32.xlu0 %v1334
        %v1336 = vpop.xlane.xlu0 %1335
        %v1337 = vrcp.pop %v1336
        %v1338 = vmul.f32 %v1333, %v1337
        %v1339 = vpack.c.bf16 %v1338, %v1338
        %1340 = vrot.lane.b32.xlu0 %v1059, 104
        %v1341 = vpop.permute.xlu0 %1340
        %v1343 = vsel %vm824, %v1339, 0
        %v1346 = vsel %vm917, %v1341, 0
        %1348 = vmatprep.subr.bf16.mxu0 0
        %1349 = vmatpush1.bf16.msra.mxu0 0
        %1350 = vmatprep.subr.bf16.mxu0 0
        %1351 = vmatpush1.bf16.msra.mxu0 0
        %1352 = vmatprep.subr.bf16.mxu0 0
        %1353 = vmatpush1.bf16.msra.mxu0 0
        %1354 = vmatprep.subr.bf16.mxu0 0
        %1355 = vmatpush1.bf16.msra.mxu0 0
        %1356 = vmatprep.subr.bf16.mxu0 0
        %1357 = vmatpush1.bf16.msra.mxu0 0
        %1358 = vmatprep.subr.bf16.mxu0 0
        %1359 = vmatpush1.bf16.msra.mxu0 0
        %1360 = vmatprep.subr.bf16.mxu0 0
        %1361 = vmatpush1.bf16.msra.mxu0 0
        %1362 = vmatprep.subr.bf16.mxu0 0
        %1363 = vmatpush1.bf16.msra.mxu0 %v1346
        %1364 = vmatprep.subr.bf16.mxu0 0
        %1365 = vmatpush2.bf16.msra.mxu0 0
        %1366 = vmatprep.subr.bf16.mxu0 0
        %1367 = vmatpush2.bf16.msra.mxu0 0
        %1368 = vmatprep.subr.bf16.mxu0 0
        %1369 = vmatpush2.bf16.msra.mxu0 0
        %1370 = vmatprep.subr.bf16.mxu0 0
        %1371 = vmatpush2.bf16.msra.mxu0 0
        %1372 = vmatprep.subr.bf16.mxu0 0
        %1373 = vmatpush2.bf16.msra.mxu0 0
        %1374 = vmatprep.subr.bf16.mxu0 0
        %1375 = vmatpush2.bf16.msra.mxu0 0
        %1376 = vmatprep.subr.bf16.mxu0 0
        %1377 = vmatpush2.bf16.msra.mxu0 0
        %1378 = vmatprep.subr.bf16.mxu0 0
        %1379 = vmatpush2.bf16.msra.mxu0 0
        %1380 = vmatprep.mubr.bf16.mxu0 0
        %1381 = vmatmul.mubr.bf16.gmra.mxu0 %v1343
        %v1382 = vpop.f32.mrf.mxu0
        %v1383 = vadd.f32 0.0, %v1382
        %v1384 = vpop.f32.mrf.mxu0
        %v1385 = vpop.f32.mrf.mxu0
        %v1386 = vpop.f32.mrf.mxu0
        %1387 = vdwg.mxu0
        %1389 = vrot.lane.b32.xlu0 %v1103, 8
        %v1390 = vpop.permute.xlu0 %1389
        %1393 = vrot.lane.b32.xlu0 %v1243, 16
        %v1394 = vpop.permute.xlu0 %1393
        %1397 = vrot.lane.b32.xlu0 %v1383, 24
        %v1398 = vpop.permute.xlu0 %1397
        %v1400 = vsel %vm824, %v956, %v1390
        %vm1401 = vcmask 130048
        %v1402 = vsel %vm1401, %v1400, %v1394
        %vm1403 = vcmask 195584
        %v1404 = vsel %vm1403, %v1402, %v1398
        %v1405 = vpack.c.bf16 %v1404, %v1404
        %v1406 = vld [vmem:[%s5] sm:$0xf]
        %v1407 = vld [vmem:[%s5 + $0x4] sm:$0xf]
        %v1408 = vld [vmem:[%s5 + $0x8] sm:$0xf]
        %v1409 = vld [vmem:[%s5 + $0xc] sm:$0xf]
        %v1410 = vld [vmem:[%s11] sm:$0x1]
        %v1412 = vlaneseq
        %v1413 = vshrl.u32 %v1412, 7
        %v1414 = vsub.s32 0, %v1413
        %v1415 = vrot.slane %v1410, %v1414
        %v1421 = vunpack.c.l.b16 %v1406
        %v1422 = vunpack.c.l.b16 %v1407
        %v1423 = vunpack.c.l.b16 %v1408
        %v1424 = vunpack.c.l.b16 %v1409
        %v1425 = vpack.c.b16 %v1422, %v1421
        %v1426 = vpack.c.b16 %v1424, %v1423
        %v1430 = vsel %vm777, %v1405, 0
        %1432 = vmatprep.subr.bf16.mxu0 0
        %1433 = vmatpush1.bf16.msra.mxu0 0
        %1434 = vmatprep.subr.bf16.mxu0 0
        %1435 = vmatpush1.bf16.msra.mxu0 0
        %1436 = vmatprep.subr.bf16.mxu0 0
        %1437 = vmatpush1.bf16.msra.mxu0 0
        %1438 = vmatprep.subr.bf16.mxu0 0
        %1439 = vmatpush1.bf16.msra.mxu0 0
        %1440 = vmatprep.subr.bf16.mxu0 0
        %1441 = vmatpush1.bf16.msra.mxu0 0
        %1442 = vmatprep.subr.bf16.mxu0 0
        %1443 = vmatpush1.bf16.msra.mxu0 0
        %1444 = vmatprep.subr.bf16.mxu0 0
        %1445 = vmatpush1.bf16.msra.mxu0 %v1426
        %1446 = vmatprep.subr.bf16.mxu0 0
        %1447 = vmatpush1.bf16.msra.mxu0 %v1425
        %1448 = vmatprep.subr.bf16.mxu0 0
        %1449 = vmatpush2.bf16.msra.mxu0 0
        %1450 = vmatprep.subr.bf16.mxu0 0
        %1451 = vmatpush2.bf16.msra.mxu0 0
        %1452 = vmatprep.subr.bf16.mxu0 0
        %1453 = vmatpush2.bf16.msra.mxu0 0
        %1454 = vmatprep.subr.bf16.mxu0 0
        %1455 = vmatpush2.bf16.msra.mxu0 0
        %1456 = vmatprep.subr.bf16.mxu0 0
        %1457 = vmatpush2.bf16.msra.mxu0 0
        %1458 = vmatprep.subr.bf16.mxu0 0
        %1459 = vmatpush2.bf16.msra.mxu0 0
        %1460 = vmatprep.subr.bf16.mxu0 0
        %1461 = vmatpush2.bf16.msra.mxu0 0
        %1462 = vmatprep.subr.bf16.mxu0 0
        %1463 = vmatpush2.bf16.msra.mxu0 0
        %1464 = vmatprep.mubr.bf16.mxu0 0
        %1465 = vmatmul.mubr.bf16.gmra.mxu0 %v1430
        %v1466 = vpop.f32.mrf.mxu0
        %v1467 = vadd.f32 %v1415, %v1466
        %v1468 = vpop.f32.mrf.mxu0
        %v1469 = vpop.f32.mrf.mxu0
        %v1470 = vpop.f32.mrf.mxu0
        %1471 = vdwg.mxu0
        %s1472 = scalar_lea.vmem %s11, 1
        %v1473 = vld [vmem:[%s1472] sm:$0x1]
        %s1474 = scalar_lea.vmem %s11, 2
        %v1475 = vld [vmem:[%s1474] sm:$0x1]
        %v1476 = vsel %vm777, %v1467, 0.0
        %1477 = vadd.xlane.f32.xlu0 %v1476
        %v1478 = vpop.xlane.xlu0 %1477
        %v1479 = vrcp.pop 32.0
        %v1480 = vmul.f32 %v1478, %v1479
        %v1481 = vsub.f32 %v1467, %v1480
        %v1482 = vmul.f32 %v1481, %v1481
        %v1483 = vsel %vm777, %v1482, 0.0
        %1484 = vadd.xlane.f32.xlu0 %v1483
        %v1485 = vpop.xlane.xlu0 %1484
        %v1486 = vmul.f32 %v1485, %v1479
        %v1487 = vadd.f32 %v1486, 1e-05
        %v1488 = vrsqrt.pop %v1487
        %v1489 = vmul.f32 %v1481, %v1488
        %v1491 = vlaneseq
        %v1492 = vshrl.u32 %v1491, 7
        %v1493 = vsub.s32 0, %v1492
        %v1494 = vrot.slane %v1473, %v1493
        %v1496 = vmul.f32 %v1489, %v1494
        %v1498 = vlaneseq
        %v1499 = vshrl.u32 %v1498, 7
        %v1500 = vsub.s32 0, %v1499
        %v1501 = vrot.slane %v1475, %v1500
        %v1503 = vadd.f32 %v1496, %v1501
        %v1504 = vadd.f32 %v752, %v1503
        %v1505 = vpack.c.bf16 %v1504, %v1504
        %v1506 = vld [vmem:[#allocation7] sm:$0xf]
        %v1507 = vld [vmem:[#allocation7 + $0x4] sm:$0xf]
        %v1508 = vld [vmem:[#allocation7 + $0x8] sm:$0xf]
        %v1509 = vld [vmem:[#allocation7 + $0xc] sm:$0xf]
        %v1510 = vld [vmem:[%s10] sm:$0x1]
        %v1512 = vlaneseq
        %v1513 = vshrl.u32 %v1512, 7
        %v1514 = vsub.s32 0, %v1513
        %v1515 = vrot.slane %v1510, %v1514
        %v1521 = vunpack.c.l.b16 %v1506
        %v1522 = vunpack.c.l.b16 %v1507
        %v1523 = vunpack.c.l.b16 %v1508
        %v1524 = vunpack.c.l.b16 %v1509
        %v1525 = vpack.c.b16 %v1522, %v1521
        %v1526 = vpack.c.b16 %v1524, %v1523
        %v1530 = vsel %vm777, %v1505, 0
        %1532 = vmatprep.subr.bf16.mxu0 0
        %1533 = vmatpush1.bf16.msra.mxu0 0
        %1534 = vmatprep.subr.bf16.mxu0 0
        %1535 = vmatpush1.bf16.msra.mxu0 0
        %1536 = vmatprep.subr.bf16.mxu0 0
        %1537 = vmatpush1.bf16.msra.mxu0 0
        %1538 = vmatprep.subr.bf16.mxu0 0
        %1539 = vmatpush1.bf16.msra.mxu0 0
        %1540 = vmatprep.subr.bf16.mxu0 0
        %1541 = vmatpush1.bf16.msra.mxu0 0
        %1542 = vmatprep.subr.bf16.mxu0 0
        %1543 = vmatpush1.bf16.msra.mxu0 0
        %1544 = vmatprep.subr.bf16.mxu0 0
        %1545 = vmatpush1.bf16.msra.mxu0 %v1526
        %1546 = vmatprep.subr.bf16.mxu0 0
        %1547 = vmatpush1.bf16.msra.mxu0 %v1525
        %1548 = vmatprep.subr.bf16.mxu0 0
        %1549 = vmatpush2.bf16.msra.mxu0 0
        %1550 = vmatprep.subr.bf16.mxu0 0
        %1551 = vmatpush2.bf16.msra.mxu0 0
        %1552 = vmatprep.subr.bf16.mxu0 0
        %1553 = vmatpush2.bf16.msra.mxu0 0
        %1554 = vmatprep.subr.bf16.mxu0 0
        %1555 = vmatpush2.bf16.msra.mxu0 0
        %1556 = vmatprep.subr.bf16.mxu0 0
        %1557 = vmatpush2.bf16.msra.mxu0 0
        %1558 = vmatprep.subr.bf16.mxu0 0
        %1559 = vmatpush2.bf16.msra.mxu0 0
        %1560 = vmatprep.subr.bf16.mxu0 0
        %1561 = vmatpush2.bf16.msra.mxu0 0
        %1562 = vmatprep.subr.bf16.mxu0 0
        %1563 = vmatpush2.bf16.msra.mxu0 0
        %1564 = vmatprep.mubr.bf16.mxu0 0
        %1565 = vmatmul.mubr.bf16.gmra.mxu0 %v1530
        %v1566 = vpop.f32.mrf.mxu0
        %v1567 = vadd.f32 %v1515, %v1566
        %v1568 = vpop.f32.mrf.mxu0
        %v1569 = vpop.f32.mrf.mxu0
        %v1570 = vpop.f32.mrf.mxu0
        %1571 = vdwg.mxu0
        %v1572 = vmul.f32 %v1567, 0.5
        %v1573 = vmul.f32 %v1567, 0.70710677
        %v1574 = vand.u32 2147483647, %v1573
        %v1575 = vmul.f32 %v1574, 0.3275911
        %v1576 = vadd.f32 %v1575, 1.0
        %v1577 = vrcp.pop %v1576
        %v1578 = vmul.f32 1.0, %v1577
        %v1579 = vmul.f32 %v1578, 1.0614054
        %v1580 = vadd.f32 %v1579, -1.4531521
        %v1581 = vmul.f32 %v1580, %v1578
        %v1582 = vadd.f32 %v1581, 1.4214138
        %v1583 = vmul.f32 %v1582, %v1578
        %v1584 = vadd.f32 %v1583, -0.28449672
        %v1585 = vmul.f32 %v1584, %v1578
        %v1586 = vadd.f32 %v1585, 0.2548296
        %v1587 = vmul.f32 %v1586, %v1578
        %v1588 = vsub.f32 0.0, %v1574
        %v1589 = vmul.f32 %v1588, %v1574
        %v1590 = vmul.f32 %v1589, 1.442695
        %v1591 = vpow.pop %v1590
        %v1592 = vmul.f32 %v1587, %v1591
        %v1593 = vsub.f32 1.0, %v1592
        %vm1594 = vcmp.lt.f32.partialorder %v1573, 0.0
        %v1595 = vsub.f32 0.0, %v1593
        %v1596 = vsel %vm1594, %v1595, %v1593
        %v1597 = vadd.f32 %v1596, 1.0
        %v1598 = vmul.f32 %v1572, %v1597
        %v1599 = vpack.c.bf16 %v1598, %v1598
        %v1600 = vld [vmem:[%s7] sm:$0xf]
        %v1601 = vld [vmem:[%s7 + $0x4] sm:$0xf]
        %v1602 = vld [vmem:[%s7 + $0x8] sm:$0xf]
        %v1603 = vld [vmem:[%s7 + $0xc] sm:$0xf]
        %v1604 = vld [vmem:[%s7 + $0x10] sm:$0xf]
        %v1605 = vld [vmem:[%s7 + $0x14] sm:$0xf]
        %v1606 = vld [vmem:[%s7 + $0x18] sm:$0xf]
        %v1607 = vld [vmem:[%s7 + $0x1c] sm:$0xf]
        %v1608 = vld [vmem:[%s7 + $0x20] sm:$0xf]
        %v1609 = vld [vmem:[%s7 + $0x24] sm:$0xf]
        %v1610 = vld [vmem:[%s7 + $0x28] sm:$0xf]
        %v1611 = vld [vmem:[%s7 + $0x2c] sm:$0xf]
        %v1612 = vld [vmem:[%s7 + $0x30] sm:$0xf]
        %v1613 = vld [vmem:[%s7 + $0x34] sm:$0xf]
        %v1614 = vld [vmem:[%s7 + $0x38] sm:$0xf]
        %v1615 = vld [vmem:[%s7 + $0x3c] sm:$0xf]
        %s1616 = scalar_lea.vmem %s11, 5
        %v1617 = vld [vmem:[%s1616] sm:$0x1]
        %v1619 = vlaneseq
        %v1620 = vshrl.u32 %v1619, 7
        %v1621 = vsub.s32 0, %v1620
        %v1622 = vrot.slane %v1617, %v1621
        %v1640 = vunpack.c.l.b16 %v1600
        %v1641 = vunpack.c.l.b16 %v1601
        %v1642 = vunpack.c.l.b16 %v1602
        %v1643 = vunpack.c.l.b16 %v1603
        %v1644 = vunpack.c.l.b16 %v1604
        %v1645 = vunpack.c.l.b16 %v1605
        %v1646 = vunpack.c.l.b16 %v1606
        %v1647 = vunpack.c.l.b16 %v1607
        %v1648 = vunpack.c.l.b16 %v1608
        %v1649 = vunpack.c.l.b16 %v1609
        %v1650 = vunpack.c.l.b16 %v1610
        %v1651 = vunpack.c.l.b16 %v1611
        %v1652 = vunpack.c.l.b16 %v1612
        %v1653 = vunpack.c.l.b16 %v1613
        %v1654 = vunpack.c.l.b16 %v1614
        %v1655 = vunpack.c.l.b16 %v1615
        %v1656 = vpack.c.b16 %v1641, %v1640
        %v1657 = vpack.c.b16 %v1643, %v1642
        %v1658 = vpack.c.b16 %v1645, %v1644
        %v1659 = vpack.c.b16 %v1647, %v1646
        %v1660 = vpack.c.b16 %v1649, %v1648
        %v1661 = vpack.c.b16 %v1651, %v1650
        %v1662 = vpack.c.b16 %v1653, %v1652
        %v1663 = vpack.c.b16 %v1655, %v1654
        %1672 = vmatprep.subr.bf16.mxu0 0
        %1673 = vmatpush1.bf16.msra.mxu0 %v1663
        %1674 = vmatprep.subr.bf16.mxu0 0
        %1675 = vmatpush1.bf16.msra.mxu0 %v1662
        %1676 = vmatprep.subr.bf16.mxu0 0
        %1677 = vmatpush1.bf16.msra.mxu0 %v1661
        %1678 = vmatprep.subr.bf16.mxu0 0
        %1679 = vmatpush1.bf16.msra.mxu0 %v1660
        %1680 = vmatprep.subr.bf16.mxu0 0
        %1681 = vmatpush1.bf16.msra.mxu0 %v1659
        %1682 = vmatprep.subr.bf16.mxu0 0
        %1683 = vmatpush1.bf16.msra.mxu0 %v1658
        %1684 = vmatprep.subr.bf16.mxu0 0
        %1685 = vmatpush1.bf16.msra.mxu0 %v1657
        %1686 = vmatprep.subr.bf16.mxu0 0
        %1687 = vmatpush1.bf16.msra.mxu0 %v1656
        %1688 = vmatprep.subr.bf16.mxu0 0
        %1689 = vmatpush2.bf16.msra.mxu0 0
        %1690 = vmatprep.subr.bf16.mxu0 0
        %1691 = vmatpush2.bf16.msra.mxu0 0
        %1692 = vmatprep.subr.bf16.mxu0 0
        %1693 = vmatpush2.bf16.msra.mxu0 0
        %1694 = vmatprep.subr.bf16.mxu0 0
        %1695 = vmatpush2.bf16.msra.mxu0 0
        %1696 = vmatprep.subr.bf16.mxu0 0
        %1697 = vmatpush2.bf16.msra.mxu0 0
        %1698 = vmatprep.subr.bf16.mxu0 0
        %1699 = vmatpush2.bf16.msra.mxu0 0
        %1700 = vmatprep.subr.bf16.mxu0 0
        %1701 = vmatpush2.bf16.msra.mxu0 0
        %1702 = vmatprep.subr.bf16.mxu0 0
        %1703 = vmatpush2.bf16.msra.mxu0 0
        %1704 = vmatprep.mubr.bf16.mxu0 0
        %1705 = vmatmul.mubr.bf16.gmra.mxu0 %v1599
        %v1706 = vpop.f32.mrf.mxu0
        %v1707 = vadd.f32 %v1622, %v1706
        %v1708 = vpop.f32.mrf.mxu0
        %v1709 = vpop.f32.mrf.mxu0
        %v1710 = vpop.f32.mrf.mxu0
        %1711 = vdwg.mxu0
        %s1712 = scalar_lea.vmem %s11, 3
        %v1713 = vld [vmem:[%s1712] sm:$0x1]
        %s1714 = scalar_lea.vmem %s11, 4
        %v1715 = vld [vmem:[%s1714] sm:$0x1]
        %v1716 = vsel %vm777, %v1707, 0.0
        %1717 = vadd.xlane.f32.xlu0 %v1716
        %v1718 = vpop.xlane.xlu0 %1717
        %v1719 = vmul.f32 %v1718, %v1479
        %v1720 = vsub.f32 %v1707, %v1719
        %v1721 = vmul.f32 %v1720, %v1720
        %v1722 = vsel %vm777, %v1721, 0.0
        %1723 = vadd.xlane.f32.xlu0 %v1722
        %v1724 = vpop.xlane.xlu0 %1723
        %v1725 = vmul.f32 %v1724, %v1479
        %v1726 = vadd.f32 %v1725, 1e-05
        %v1727 = vrsqrt.pop %v1726
        %v1728 = vmul.f32 %v1720, %v1727
        %v1730 = vlaneseq
        %v1731 = vshrl.u32 %v1730, 7
        %v1732 = vsub.s32 0, %v1731
        %v1733 = vrot.slane %v1713, %v1732
        %v1735 = vmul.f32 %v1728, %v1733
        %v1737 = vlaneseq
        %v1738 = vshrl.u32 %v1737, 7
        %v1739 = vsub.s32 0, %v1738
        %v1740 = vrot.slane %v1715, %v1739
        %v1742 = vadd.f32 %v1735, %v1740
        %v1743 = vadd.f32 %v1504, %v1742
        %1744 = vst.msk [vmem:[%s478] sm:$0xff] %vm777, %v1743
        %s1745 = sand.u32 %s316, 1
        %s1746 = scalar_lea.sflag [#allocation6], %s1745
        %s1747 = sand.u32 %s316, 1
        %s1748 = smul.addr %s1747, 8
        %s1749 = scalar_lea.vmem [#allocation9], %s1748
        // Predicated region
        $region81: #{tpu_custom_call.1} parent=67 // pred_check
          %p1750 = pneg %p326
        $region82: #{tpu_custom_call.1} parent=67 // pred_check_branch
          %1752 = sbr.rel (%p1750) target = $region84
        $region83: #{tpu_custom_call.1} parent=67 // pred_region
          %s1754 = ssub.s32 128, 128
          %1755 = vsyncadd %s1746, %s1754
          %s1756 = sadd.s32 %s35, %s34
          %s1757 = smul.addr %s1756, 128
          %s1758 = scalar_lea.hbm %s12, %s1757
          %s1760 = sshll.u32 %s1749, 4
          %s1761 = int_to_ptr.vmem [resolvable:$true] %s1760
          %1763 = dma.vmem_to_hbm [thread:$0]  %s1761, 128, %s1758, %s1746
        $region84: #{tpu_custom_call.1} parent=67 // pred_fallthru
          _
      $region68: #{tpu_custom_call.1} parent=5 // pred_fallthru
        _
      %p1764 = scmp.le.s32.totalorder 2, %s25
      // Predicated region
      $region85: #{tpu_custom_call.1} parent=5 // pred_check
        %p1765 = pneg %p1764
      $region86: #{tpu_custom_call.1} parent=5 // pred_check_branch
        %1767 = sbr.rel (%p1765) target = $region88
      $region87: #{tpu_custom_call.1} parent=5 // pred_region
        %s1768 = ssub.s32 %s25, 2
        // Predicated region
        $region89: #{tpu_custom_call.1} parent=87 // pred_check
          %p1769 = pneg %p332
        $region90: #{tpu_custom_call.1} parent=87 // pred_check_branch
          %1771 = sbr.rel (%p1769) target = $region92
        $region91: #{tpu_custom_call.1} parent=87 // pred_region
          %s1772 = sand.u32 %s317, 1
          %s1773 = scalar_lea.sflag [#allocation6], %s1772
          %s1774 = sand.u32 %s317, 1
          %s1775 = smul.addr %s1774, 8
          %s1776 = scalar_lea.vmem [#allocation9], %s1775
          %1777 = dma.done %s1773, 128
        $region92: #{tpu_custom_call.1} parent=87 // pred_fallthru
          _
      $region88: #{tpu_custom_call.1} parent=5 // pred_fallthru
        _
    $region6: #{tpu_custom_call.1} parent=1 // loop_footer
      %s29 = sadd.s32 1, %s25
    $region7: #{tpu_custom_call.1} parent=1 // loop_footer_branch
      %24 = sbr.rel target = $region3
    $region8: #{tpu_custom_call.1} parent=1 // loop_exit
      _
    %1778 = vsyncpa [#allocation5], 1
    %s1779 = scalar_lea.sflag [#allocation5], 1
    %1780 = vsyncpa %s1779, 1
    %1781 = vsyncpa [#allocation8], 1
    %1782 = vsyncpa [#allocation6], 1
    %s1783 = scalar_lea.sflag [#allocation6], 1
    %1784 = vsyncpa %s1783, 1

</llo_original>
